<compile_context>
chip_gen: v7x
topology: tpu7x:2x2x1
jax: 0.10.0
libtpu: 0.0.40
codegen_flags: <defaults>
</compile_context>

<pallas_src>
import functools
import math

import numpy as np
import jax
import jax.numpy as jnp
from jax import lax
from jax.experimental import pallas as pl
from jax.experimental.pallas import tpu as pltpu

NEG_INF = -1000000000.0


def _round_up(x: int, m: int) -> int:
    return (x + m - 1) // m * m


def _select_entity_head_kernel(ae_ref, ke_ref, qm_ref, km_ref, act_ref,
                               wq_ref, bq_ref, wk_ref, bk_ref,
                               logits_ref, stats_ref,
                               *, bt, a, e, d, dq):
    # ---- query / key projections (scale already folded into wq / bq) ----
    q = (jnp.dot(ae_ref[...].reshape(bt * a, d), wq_ref[...],
                 preferred_element_type=jnp.float32)
         + bq_ref[...]).reshape(bt, a, dq)
    k = (jnp.dot(ke_ref[...].reshape(bt * e, d), wk_ref[...],
                 preferred_element_type=jnp.float32)
         + bk_ref[...]).reshape(bt, e, dq)

    # ---- batched scores q @ k^T (contraction on last dims, no transpose) ----
    s = lax.dot_general(q, k, (((2,), (2,)), ((0,), (0,))),
                        preferred_element_type=jnp.float32)      # (bt, a, e)

    qm = qm_ref[...]                                             # (bt, a)
    km = km_ref[...]                                             # (bt, e)
    valid = (qm[:, :, None] > 0.0) & (km[:, None, :] > 0.0)
    logits = jnp.where(valid, s, NEG_INF)

    # ---- fused categorical stats: z computed once, reused ----
    m = jnp.max(logits, axis=-1, keepdims=True)                  # (bt, a, 1)
    z = logits - m
    ex = jnp.exp(z)
    denom = jnp.sum(ex, axis=-1, keepdims=True)
    log_denom = jnp.log(denom)
    inv_denom = pl.reciprocal(denom, approx=True)

    # Picked logit via select + max (no float one-hot temp); non-selected lanes
    # become NEG_INF, so the max returns the selected column's logit.
    act = act_ref[...]                                           # (bt, a) int32
    cols = lax.broadcasted_iota(jnp.int32, (bt, a, e), 2)
    picked = jnp.max(jnp.where(cols == act[:, :, None], logits, NEG_INF),
                     axis=-1, keepdims=True)

    logprob = (picked - m - log_denom).reshape(1, bt * a)
    entropy = (log_denom - jnp.sum(ex * z, axis=-1, keepdims=True) * inv_denom
               ).reshape(1, bt * a)

    logits_ref[...] = logits.astype(logits_ref.dtype)
    # Single lane-dense slab store instead of two narrow masked stores.
    stats_ref[...] = jnp.concatenate([logprob, entropy], axis=0)[None]


def padded_select_entity_head(padded_actor_embeds, padded_actee_embeds,
                              query_mask, key_mask, padded_actions,
                              wq, bq, wk, bk, *, block_b=None):
    """Runs the Pallas kernel over the batch. Returns (logits, logprob, entropy)."""
    B, A, D = padded_actor_embeds.shape
    E = padded_actee_embeds.shape[1]
    Dq = wq.shape[1]

    # Align the dominant tile: actors -> sublane multiple (8), actees -> lane
    # multiple (128). Padded positions have mask 0 -> NEG_INF -> no effect.
    A_pad = _round_up(A, 8)
    E_pad = _round_up(E, 128)

    # Per-env VMEM footprint: double-buffered I/O tiles (bf16 embeds + f32
    # logits) plus the in-kernel (A, E)-sized intermediates and projections.
    io_bytes = (2 * (A_pad + E_pad) * D              # bf16 actor / actee embeds
                + 4 * A_pad * E_pad                  # f32 logits output tile
                + 4 * (5 * A_pad + E_pad))           # masks / actions / stats
    live_bytes = (3 * 4 * A_pad * E_pad              # s|logits, z|ex, select tmp
                  + 4 * (A_pad + E_pad) * Dq)        # q / k projections (f32)
    per_env = 2 * io_bytes + live_bytes

    try:
        vmem_cap = int(pltpu.get_tpu_info().vmem_capacity_bytes)
    except Exception:
        vmem_cap = 64 * 1024 * 1024                  # conservative (v7x per-TC)

    if block_b is None:
        budget = int(vmem_cap * 0.6)
        block_b = max(8, min(512, (budget // max(per_env, 1)) // 8 * 8))
    block_b = max(8, min(int(block_b), _round_up(B, 8)))
    block_b = _round_up(block_b, 8)
    # Keep >= 2 grid steps when possible so both TensorCores get work on v7x.
    while block_b > 8 and _round_up(B, block_b) // block_b < 2:
        block_b = _round_up(block_b // 2, 8)
    B_pad = _round_up(B, block_b)
    nb = B_pad // block_b

    def maybe_pad_cast(x, shape, dtype):
        # Only pad / cast when the producer did not already align the input.
        if x.shape != shape:
            x = jnp.pad(x, [(0, t - s) for s, t in zip(x.shape, shape)])
        if x.dtype != dtype:
            x = x.astype(dtype)
        return x

    ae = maybe_pad_cast(padded_actor_embeds, (B_pad, A_pad, D), jnp.bfloat16)
    ke = maybe_pad_cast(padded_actee_embeds, (B_pad, E_pad, D), jnp.bfloat16)
    qm = maybe_pad_cast(query_mask, (B_pad, A_pad), jnp.float32)
    km = maybe_pad_cast(key_mask, (B_pad, E_pad), jnp.float32)
    act = maybe_pad_cast(padded_actions, (B_pad, A_pad), jnp.int32)

    # Fold 1/sqrt(Dq) into the query projection (exact for power-of-two Dq).
    scale = 1.0 / math.sqrt(Dq)
    wq_s = (wq.astype(jnp.float32) * scale).astype(jnp.bfloat16)
    bq_s = (bq.reshape(1, Dq).astype(jnp.float32) * scale)
    wk_b = wk.astype(jnp.bfloat16)
    bk_b = bk.reshape(1, Dq).astype(jnp.float32)

    kernel = functools.partial(_select_entity_head_kernel,
                               bt=block_b, a=A_pad, e=E_pad, d=D, dq=Dq)

    grid = (nb,)
    out_shape = (
        jax.ShapeDtypeStruct((B_pad, A_pad, E_pad), jnp.float32),   # logits
        jax.ShapeDtypeStruct((nb, 2, block_b * A_pad), jnp.float32),  # lp|ent
    )
    in_specs = [
        pl.BlockSpec((block_b, A_pad, D), lambda b: (b, 0, 0)),     # actor embeds
        pl.BlockSpec((block_b, E_pad, D), lambda b: (b, 0, 0)),     # actee embeds
        pl.BlockSpec((block_b, A_pad), lambda b: (b, 0)),           # query mask
        pl.BlockSpec((block_b, E_pad), lambda b: (b, 0)),           # key mask
        pl.BlockSpec((block_b, A_pad), lambda b: (b, 0)),           # actions
        pl.BlockSpec((D, Dq), lambda b: (0, 0)),                    # Wq (scaled)
        pl.BlockSpec((1, Dq), lambda b: (0, 0)),                    # bq (scaled)
        pl.BlockSpec((D, Dq), lambda b: (0, 0)),                    # Wk
        pl.BlockSpec((1, Dq), lambda b: (0, 0)),                    # bk
    ]
    out_specs = (
        pl.BlockSpec((block_b, A_pad, E_pad), lambda b: (b, 0, 0)),
        pl.BlockSpec((1, 2, block_b * A_pad), lambda b: (b, 0, 0)),
    )

    weight_bytes = 2 * (2 * D * Dq * 2 + 2 * Dq * 4)
    vmem_limit = int(min(vmem_cap,
                         max(32 * 1024 * 1024,
                             2 * per_env * block_b + weight_bytes + (1 << 20))))

    logits, stats = pl.pallas_call(
        kernel,
        out_shape=out_shape,
        grid=grid,
        in_specs=in_specs,
        out_specs=out_specs,
        compiler_params=pltpu.CompilerParams(
            dimension_semantics=("parallel",),
            vmem_limit_bytes=vmem_limit),
    )(ae, ke, qm, km, act, wq_s, bq_s, wk_b, bk_b)

    stats = stats.reshape(nb, 2, block_b, A_pad)
    logprob = stats[:, 0].reshape(B_pad, A_pad)[:B, :A]
    entropy = stats[:, 1].reshape(B_pad, A_pad)[:B, :A]
    return logits[:B, :A, :E], logprob, entropy


if __name__ == "__main__":
    d_model = 32
    d_qk = 16

    # Ragged structure (glue, mirrors RaggedBuffer inputs of the torch module).
    entity_lengths = np.array([5, 7], dtype=np.int64)          # entities per env
    index_offsets = np.array([0, 5], dtype=np.int64)           # flat offsets per env
    actor_idx = [np.array([0, 2]), np.array([1, 3, 4])]        # per-env actor ids
    actee_idx = [np.array([1, 2, 3]), np.array([0, 2, 5, 6])]  # per-env actee ids
    prev_actions_ragged = [np.array([1, 0]), np.array([2, 3, 1])]
    # TODO(synk): prev_actions=None (Categorical.sample) path not implemented in-kernel.

    B = len(entity_lengths)
    n_entities = int(entity_lengths.sum())
    actor_lengths = np.array([len(a) for a in actor_idx], dtype=np.int64)
    max_actors = int(actor_lengths.max())
    max_actees = int(max(len(a) for a in actee_idx))

    # Produce padded tensors already (8, 128)-aligned and bf16 so the wrapper
    # does not need an extra pad+cast HBM round trip.
    A_pad = _round_up(max_actors, 8)
    E_pad = _round_up(max_actees, 128)

    key = jax.random.PRNGKey(0)
    kx, kwq, kbq, kwk, kbk = jax.random.split(key, 5)
    x_data = jax.random.normal(kx, (n_entities, d_model), dtype=jnp.float32)
    wq = jax.random.normal(kwq, (d_model, d_qk), dtype=jnp.float32) / math.sqrt(d_model)
    bq = jax.random.normal(kbq, (1, d_qk), dtype=jnp.float32) * 0.01
    wk = jax.random.normal(kwk, (d_model, d_qk), dtype=jnp.float32) / math.sqrt(d_model)
    bk = jax.random.normal(kbk, (1, d_qk), dtype=jnp.float32) * 0.01

    # ---- glue: ragged gather + aligned padding (matches torch preprocessing) ----
    actors_global = np.concatenate([a + off for a, off in zip(actor_idx, index_offsets)])
    actees_global = np.concatenate([a + off for a, off in zip(actee_idx, index_offsets)])
    qindices = np.concatenate([np.arange(len(a)) + b * A_pad
                               for b, a in enumerate(actor_idx)])
    kindices = np.concatenate([np.arange(len(a)) + b * E_pad
                               for b, a in enumerate(actee_idx)])

    actor_embeds = x_data[actors_global]                        # (n_actors, d_model)
    actee_embeds = x_data[actees_global]                        # (n_actees, d_model)

    padded_actor_embeds = (jnp.zeros((B * A_pad, d_model), jnp.bfloat16)
                           .at[qindices].set(actor_embeds.astype(jnp.bfloat16))
                           .reshape(B, A_pad, d_model))
    padded_actee_embeds = (jnp.zeros((B * E_pad, d_model), jnp.bfloat16)
                           .at[kindices].set(actee_embeds.astype(jnp.bfloat16))
                           .reshape(B, E_pad, d_model))
    query_mask = (jnp.zeros((B * A_pad,), jnp.float32)
                  .at[qindices].set(1.0).reshape(B, A_pad))
    key_mask = (jnp.zeros((B * E_pad,), jnp.float32)
                .at[kindices].set(1.0).reshape(B, E_pad))

    action_flat = np.concatenate(prev_actions_ragged).astype(np.int32)
    padded_actions = (jnp.ones((B * A_pad,), jnp.int32)
                      .at[qindices].set(jnp.asarray(action_flat))
                      .reshape(B, A_pad))

    # ---- Pallas kernel ----
    logits, logprob, entropy = padded_select_entity_head(
        padded_actor_embeds, padded_actee_embeds,
        query_mask, key_mask, padded_actions, wq, bq, wk, bk)
    jax.block_until_ready((logits, logprob, entropy))

    # Module return values (flattened at valid actor positions).
    action_out = np.asarray(padded_actions).reshape(-1)[qindices]
    logprob_out = np.asarray(logprob).reshape(-1)[qindices]
    entropy_out = np.asarray(entropy).reshape(-1)[qindices]

    # ---- plain-JAX reference check (same bf16-quantized embeds / weights) ----
    ae_f = padded_actor_embeds.astype(jnp.float32)
    ke_f = padded_actee_embeds.astype(jnp.float32)
    wq_r = wq.astype(jnp.bfloat16).astype(jnp.float32)
    wk_r = wk.astype(jnp.bfloat16).astype(jnp.float32)
    q_r = ae_f @ wq_r + bq
    k_r = ke_f @ wk_r + bk
    s_r = jnp.einsum('bad,bed->bae', q_r, k_r) / math.sqrt(d_qk)
    lmask = query_mask[:, :, None] * key_mask[:, None, :]
    logits_r = jnp.where(lmask == 0.0, NEG_INF, s_r)
    logp_r = jax.nn.log_softmax(logits_r, axis=-1)
    ent_r = -jnp.sum(jnp.exp(logp_r) * logp_r, axis=-1)
    lp_r = jnp.take_along_axis(logp_r, padded_actions[..., None], axis=-1)[..., 0]

    assert np.allclose(np.asarray(logits), np.asarray(logits_r), rtol=2e-2, atol=2e-2)
    assert np.allclose(logprob_out, np.asarray(lp_r).reshape(-1)[qindices],
                       rtol=2e-2, atol=2e-2)
    assert np.allclose(entropy_out, np.asarray(ent_r).reshape(-1)[qindices],
                       rtol=2e-2, atol=2e-2)
    assert np.array_equal(action_out, action_flat)

    print("KERNEL_OK")
</pallas_src>

<mosaic_0001>
module attributes {stable_mosaic.version = 11 : i64} {
  func.func @_select_entity_head_kernel(%arg0: i32, %arg1: memref<8x8x32xbf16, #tpu.memory_space<vmem>>, %arg2: memref<8x128x32xbf16, #tpu.memory_space<vmem>>, %arg3: memref<8x8xf32, #tpu.memory_space<vmem>>, %arg4: memref<8x128xf32, #tpu.memory_space<vmem>>, %arg5: memref<8x8xi32, #tpu.memory_space<vmem>>, %arg6: memref<32x16xbf16, #tpu.memory_space<vmem>>, %arg7: memref<1x16xf32, #tpu.memory_space<vmem>>, %arg8: memref<32x16xbf16, #tpu.memory_space<vmem>>, %arg9: memref<1x16xf32, #tpu.memory_space<vmem>>, %arg10: memref<8x8x128xf32, #tpu.memory_space<vmem>>, %arg11: memref<1x2x64xf32, #tpu.memory_space<vmem>>) attributes {dimension_semantics = [#tpu.dimension_semantics<parallel>], iteration_bounds = array<i64: 1>, scalar_prefetch = 0 : i64, scratch_operands = 0 : i64, tpu.core_type = #tpu.core_type<tc>, window_params = [{transform_indices = @transform_0, window_bounds = array<i64: 8, 8, 32>}, {transform_indices = @transform_1, window_bounds = array<i64: 8, 128, 32>}, {transform_indices = @transform_2, window_bounds = array<i64: 8, 8>}, {transform_indices = @transform_3, window_bounds = array<i64: 8, 128>}, {transform_indices = @transform_4, window_bounds = array<i64: 8, 8>}, {pipeline_mode = #tpu.pipeline_mode<synchronous>, transform_indices = @transform_5, window_bounds = array<i64: 32, 16>}, {pipeline_mode = #tpu.pipeline_mode<synchronous>, transform_indices = @transform_6, window_bounds = array<i64: 1, 16>}, {pipeline_mode = #tpu.pipeline_mode<synchronous>, transform_indices = @transform_7, window_bounds = array<i64: 32, 16>}, {pipeline_mode = #tpu.pipeline_mode<synchronous>, transform_indices = @transform_8, window_bounds = array<i64: 1, 16>}, {transform_indices = @transform_9, window_bounds = array<i64: 8, 8, 128>}, {transform_indices = @transform_10, window_bounds = array<i64: 1, 2, 64>}]} {
    %c0 = arith.constant 0 : index
    %c0_0 = arith.constant 0 : index
    %c0_1 = arith.constant 0 : index
    %0 = vector.load %arg1[%c0, %c0_0, %c0_1] : memref<8x8x32xbf16, #tpu.memory_space<vmem>>, vector<8x8x32xbf16>
    %1 = vector.shape_cast %0 : vector<8x8x32xbf16> to vector<64x32xbf16>
    %c0_2 = arith.constant 0 : index
    %c0_3 = arith.constant 0 : index
    %2 = vector.load %arg6[%c0_2, %c0_3] : memref<32x16xbf16, #tpu.memory_space<vmem>>, vector<32x16xbf16>
    %cst = arith.constant dense<0.000000e+00> : vector<64x16xf32>
    %3 = tpu.matmul %1, %2, %cst {dimension_numbers = #tpu.dot_dimension_numbers<[1], [0], [0], [1], [0, 0, 1, 1], [], []>} : vector<64x32xbf16>, vector<32x16xbf16>, vector<64x16xf32> -> vector<64x16xf32>
    %c0_4 = arith.constant 0 : index
    %c0_5 = arith.constant 0 : index
    %4 = vector.load %arg7[%c0_4, %c0_5] : memref<1x16xf32, #tpu.memory_space<vmem>>, vector<1x16xf32>
    %5 = vector.broadcast %4 : vector<1x16xf32> to vector<64x16xf32>
    %6 = arith.addf %3, %5 : vector<64x16xf32>
    %7 = vector.shape_cast %6 : vector<64x16xf32> to vector<8x8x16xf32>
    %c0_6 = arith.constant 0 : index
    %c0_7 = arith.constant 0 : index
    %c0_8 = arith.constant 0 : index
    %8 = vector.load %arg2[%c0_6, %c0_7, %c0_8] : memref<8x128x32xbf16, #tpu.memory_space<vmem>>, vector<8x128x32xbf16>
    %9 = vector.shape_cast %8 : vector<8x128x32xbf16> to vector<1024x32xbf16>
    %c0_9 = arith.constant 0 : index
    %c0_10 = arith.constant 0 : index
    %10 = vector.load %arg8[%c0_9, %c0_10] : memref<32x16xbf16, #tpu.memory_space<vmem>>, vector<32x16xbf16>
    %cst_11 = arith.constant dense<0.000000e+00> : vector<1024x16xf32>
    %11 = tpu.matmul %9, %10, %cst_11 {dimension_numbers = #tpu.dot_dimension_numbers<[1], [0], [0], [1], [0, 0, 1, 1], [], []>} : vector<1024x32xbf16>, vector<32x16xbf16>, vector<1024x16xf32> -> vector<1024x16xf32>
    %c0_12 = arith.constant 0 : index
    %c0_13 = arith.constant 0 : index
    %12 = vector.load %arg9[%c0_12, %c0_13] : memref<1x16xf32, #tpu.memory_space<vmem>>, vector<1x16xf32>
    %13 = vector.broadcast %12 : vector<1x16xf32> to vector<1024x16xf32>
    %14 = arith.addf %11, %13 : vector<1024x16xf32>
    %15 = vector.shape_cast %14 : vector<1024x16xf32> to vector<8x128x16xf32>
    %cst_14 = arith.constant dense<0.000000e+00> : vector<8x8x128xf32>
    %16 = tpu.matmul %7, %15, %cst_14 {dimension_numbers = #tpu.dot_dimension_numbers<[2], [2], [1], [1], [0, 0, 0, 1, 1, 1], [0], [0]>} : vector<8x8x16xf32>, vector<8x128x16xf32>, vector<8x8x128xf32> -> vector<8x8x128xf32>
    %c0_15 = arith.constant 0 : index
    %c0_16 = arith.constant 0 : index
    %17 = vector.load %arg3[%c0_15, %c0_16] : memref<8x8xf32, #tpu.memory_space<vmem>>, vector<8x8xf32>
    %c0_17 = arith.constant 0 : index
    %c0_18 = arith.constant 0 : index
    %18 = vector.load %arg4[%c0_17, %c0_18] : memref<8x128xf32, #tpu.memory_space<vmem>>, vector<8x128xf32>
    %19 = vector.shape_cast %17 : vector<8x8xf32> to vector<8x8x1xf32>
    %cst_19 = arith.constant 0.000000e+00 : f32
    %20 = vector.broadcast %cst_19 : f32 to vector<8x8x1xf32>
    %21 = arith.cmpf ogt, %19, %20 : vector<8x8x1xf32>
    %22 = vector.shape_cast %18 : vector<8x128xf32> to vector<8x1x128xf32>
    %cst_20 = arith.constant 0.000000e+00 : f32
    %23 = vector.broadcast %cst_20 : f32 to vector<8x1x128xf32>
    %24 = arith.cmpf ogt, %22, %23 : vector<8x1x128xf32>
    %25 = vector.broadcast %21 : vector<8x8x1xi1> to vector<8x8x128xi1>
    %26 = vector.broadcast %24 : vector<8x1x128xi1> to vector<8x8x128xi1>
    %27 = arith.andi %25, %26 : vector<8x8x128xi1>
    %cst_21 = arith.constant -1.000000e+09 : f32
    %28 = vector.broadcast %cst_21 : f32 to vector<8x8x128xf32>
    %29 = arith.select %27, %16, %28 : vector<8x8x128xi1>, vector<8x8x128xf32>
    %cst_22 = arith.constant dense<0xFF800000> : vector<8x8xf32>
    %30 = vector.multi_reduction <maximumf>, %29, %cst_22 [2] : vector<8x8x128xf32> to vector<8x8xf32>
    %31 = vector.shape_cast %30 : vector<8x8xf32> to vector<8x8x1xf32>
    %32 = vector.broadcast %31 : vector<8x8x1xf32> to vector<8x8x128xf32>
    %33 = arith.subf %29, %32 : vector<8x8x128xf32>
    %34 = math.exp %33 : vector<8x8x128xf32>
    %cst_23 = arith.constant dense<0.000000e+00> : vector<8x8xf32>
    %35 = vector.multi_reduction <add>, %34, %cst_23 [2] : vector<8x8x128xf32> to vector<8x8xf32>
    %36 = vector.shape_cast %35 : vector<8x8xf32> to vector<8x8x1xf32>
    %37 = math.log %36 : vector<8x8x1xf32>
    %38 = tpu.reciprocal %36 {approx = true} : vector<8x8x1xf32> -> vector<8x8x1xf32>
    %c0_24 = arith.constant 0 : index
    %c0_25 = arith.constant 0 : index
    %39 = vector.load %arg5[%c0_24, %c0_25] : memref<8x8xi32, #tpu.memory_space<vmem>>, vector<8x8xi32>
    %40 = tpu.iota {dimensions = array<i32: 2>} : vector<8x8x128xi32>
    %41 = vector.shape_cast %39 : vector<8x8xi32> to vector<8x8x1xi32>
    %42 = vector.broadcast %41 : vector<8x8x1xi32> to vector<8x8x128xi32>
    %43 = arith.cmpi eq, %40, %42 : vector<8x8x128xi32>
    %cst_26 = arith.constant -1.000000e+09 : f32
    %44 = vector.broadcast %cst_26 : f32 to vector<8x8x128xf32>
    %45 = arith.select %43, %29, %44 : vector<8x8x128xi1>, vector<8x8x128xf32>
    %cst_27 = arith.constant dense<0xFF800000> : vector<8x8xf32>
    %46 = vector.multi_reduction <maximumf>, %45, %cst_27 [2] : vector<8x8x128xf32> to vector<8x8xf32>
    %47 = vector.shape_cast %46 : vector<8x8xf32> to vector<8x8x1xf32>
    %48 = arith.subf %47, %31 : vector<8x8x1xf32>
    %49 = arith.subf %48, %37 : vector<8x8x1xf32>
    %50 = vector.shape_cast %49 : vector<8x8x1xf32> to vector<1x64xf32>
    %51 = arith.mulf %34, %33 : vector<8x8x128xf32>
    %cst_28 = arith.constant dense<0.000000e+00> : vector<8x8xf32>
    %52 = vector.multi_reduction <add>, %51, %cst_28 [2] : vector<8x8x128xf32> to vector<8x8xf32>
    %53 = vector.shape_cast %52 : vector<8x8xf32> to vector<8x8x1xf32>
    %54 = arith.mulf %53, %38 : vector<8x8x1xf32>
    %55 = arith.subf %37, %54 : vector<8x8x1xf32>
    %56 = vector.shape_cast %55 : vector<8x8x1xf32> to vector<1x64xf32>
    %c0_29 = arith.constant 0 : index
    %c0_30 = arith.constant 0 : index
    %c0_31 = arith.constant 0 : index
    %57 = vector.load %arg10[%c0_29, %c0_30, %c0_31] : memref<8x8x128xf32, #tpu.memory_space<vmem>>, vector<8x8x128xf32>
    tpu.vector_store %arg10[%c0_29, %c0_30, %c0_31], %29 {strides = array<i32>} : memref<8x8x128xf32, #tpu.memory_space<vmem>>, vector<8x8x128xf32>,
    %58 = tpu.concatenate %50, %56 in 0 : vector<1x64xf32>, vector<1x64xf32> -> vector<2x64xf32>
    %59 = vector.shape_cast %58 : vector<2x64xf32> to vector<1x2x64xf32>
    %c0_32 = arith.constant 0 : index
    %c0_33 = arith.constant 0 : index
    %c0_34 = arith.constant 0 : index
    %60 = vector.load %arg11[%c0_32, %c0_33, %c0_34] : memref<1x2x64xf32, #tpu.memory_space<vmem>>, vector<1x2x64xf32>
    tpu.vector_store %arg11[%c0_32, %c0_33, %c0_34], %59 {strides = array<i32>} : memref<1x2x64xf32, #tpu.memory_space<vmem>>, vector<1x2x64xf32>,
    return
  }
  func.func @transform_0(%arg0: i32) -> (i32, i32, i32) {
    %c0_i32 = arith.constant 0 : i32
    %c0_i32_0 = arith.constant 0 : i32
    %c0_i32_1 = arith.constant 0 : i32
    return %arg0, %c0_i32, %c0_i32_0 : i32, i32, i32
  }
  func.func @transform_1(%arg0: i32) -> (i32, i32, i32) {
    %c0_i32 = arith.constant 0 : i32
    %c0_i32_0 = arith.constant 0 : i32
    %c0_i32_1 = arith.constant 0 : i32
    return %arg0, %c0_i32, %c0_i32_0 : i32, i32, i32
  }
  func.func @transform_2(%arg0: i32) -> (i32, i32) {
    %c0_i32 = arith.constant 0 : i32
    %c0_i32_0 = arith.constant 0 : i32
    return %arg0, %c0_i32 : i32, i32
  }
  func.func @transform_3(%arg0: i32) -> (i32, i32) {
    %c0_i32 = arith.constant 0 : i32
    %c0_i32_0 = arith.constant 0 : i32
    return %arg0, %c0_i32 : i32, i32
  }
  func.func @transform_4(%arg0: i32) -> (i32, i32) {
    %c0_i32 = arith.constant 0 : i32
    %c0_i32_0 = arith.constant 0 : i32
    return %arg0, %c0_i32 : i32, i32
  }
  func.func @transform_5(%arg0: i32) -> (i32, i32) {
    %c0_i32 = arith.constant 0 : i32
    %c0_i32_0 = arith.constant 0 : i32
    %c0_i32_1 = arith.constant 0 : i32
    return %c0_i32, %c0_i32_0 : i32, i32
  }
  func.func @transform_6(%arg0: i32) -> (i32, i32) {
    %c0_i32 = arith.constant 0 : i32
    %c0_i32_0 = arith.constant 0 : i32
    %c0_i32_1 = arith.constant 0 : i32
    return %c0_i32, %c0_i32_0 : i32, i32
  }
  func.func @transform_7(%arg0: i32) -> (i32, i32) {
    %c0_i32 = arith.constant 0 : i32
    %c0_i32_0 = arith.constant 0 : i32
    %c0_i32_1 = arith.constant 0 : i32
    return %c0_i32, %c0_i32_0 : i32, i32
  }
  func.func @transform_8(%arg0: i32) -> (i32, i32) {
    %c0_i32 = arith.constant 0 : i32
    %c0_i32_0 = arith.constant 0 : i32
    %c0_i32_1 = arith.constant 0 : i32
    return %c0_i32, %c0_i32_0 : i32, i32
  }
  func.func @transform_9(%arg0: i32) -> (i32, i32, i32) {
    %c0_i32 = arith.constant 0 : i32
    %c0_i32_0 = arith.constant 0 : i32
    %c0_i32_1 = arith.constant 0 : i32
    return %arg0, %c0_i32, %c0_i32_0 : i32, i32, i32
  }
  func.func @transform_10(%arg0: i32) -> (i32, i32, i32) {
    %c0_i32 = arith.constant 0 : i32
    %c0_i32_0 = arith.constant 0 : i32
    %c0_i32_1 = arith.constant 0 : i32
    return %arg0, %c0_i32, %c0_i32_0 : i32, i32, i32
  }
}

</mosaic_0001>

<llo_original>
// kernel: tpu_custom_call.1
$region0: #{tpu_custom_call.1}
  #allocation0 [shape = 'u32[]', space=smem, size = 0x4, offset = 0x4, fixed_abs, tag = 'smem constant byte address 0x4 - core index']
  #allocation1 [shape = 'u32[144,128]{1,0:T(1,128)}', space=vmem, size = 0x12000, scoped, tag = 'internal scratch']
  %s0 = inlined_call_operand.vmem [shape: bf16[8,8,32], index: 0, kind: input, shape index: {}]
  %s1 = inlined_call_operand.vmem [shape: bf16[8,128,32], index: 1, kind: input, shape index: {}]
  %s2 = inlined_call_operand.vmem [shape: f32[8,8], index: 2, kind: input, shape index: {}]
  %s3 = inlined_call_operand.vmem [shape: f32[8,128], index: 3, kind: input, shape index: {}]
  %s4 = inlined_call_operand.vmem [shape: s32[8,8], index: 4, kind: input, shape index: {}]
  %s5 = inlined_call_operand.vmem [shape: bf16[32,16], index: 5, kind: input, shape index: {}]
  %s6 = inlined_call_operand.vmem [shape: f32[1,16], index: 6, kind: input, shape index: {}]
  %s7 = inlined_call_operand.vmem [shape: bf16[32,16], index: 7, kind: input, shape index: {}]
  %s8 = inlined_call_operand.vmem [shape: f32[1,16], index: 8, kind: input, shape index: {}]
  %s9 = inlined_call_operand.hbm [shape: f32[8,8,128], index: 9, kind: output, shape index: {0}]
  %s10 = inlined_call_operand.hbm [shape: f32[1,2,64], index: 10, kind: output, shape index: {1}]
  %11 = xla_tuple %s9, %s10
  %s12 = sld [smem:[#allocation0]]
  $region54: #{tpu_custom_call.1} parent=0
    _
  %s14 = ssub.s32 1, %s12
  %s15 = scalar_select 0, %s14, %s12
  $region1: #{tpu_custom_call.1} parent=0
    #allocation2 [shape = 'u8[32768]{0}', space=vmem, size = 0x8000, scoped, tag = 'output window, operand 0, single buffered']
    #allocation3 [shape = 's32[1]{0}', space=sflag, size = 0x4, scoped, tag = 'scoped memory for tpu_custom_call.1']
    #allocation4 [shape = 'u8[1024]{0}', space=vmem, size = 0x400, scoped, tag = 'output window, operand 1, single buffered']
    #allocation5 [shape = 's32[1]{0}', space=sflag, size = 0x4, scoped, tag = 'scoped memory for tpu_custom_call.1']
    %16 = vsyncpa [#allocation3], 0
    %17 = vsyncpa [#allocation5], 0
    // Predicated region
    $region2: #{tpu_custom_call.1} parent=1 // pred_check
      _
    $region3: #{tpu_custom_call.1} parent=1 // pred_check_branch
      %19 = sbr.rel (0) target = $region5
    $region4: #{tpu_custom_call.1} parent=1 // pred_region
      _
    $region5: #{tpu_custom_call.1} parent=1 // pred_fallthru
      _
    // Predicated region
    $region6: #{tpu_custom_call.1} parent=1 // pred_check
      _
    $region7: #{tpu_custom_call.1} parent=1 // pred_check_branch
      %21 = sbr.rel (0) target = $region9
    $region8: #{tpu_custom_call.1} parent=1 // pred_region
      _
    $region9: #{tpu_custom_call.1} parent=1 // pred_fallthru
      _
    // Predicated region
    $region10: #{tpu_custom_call.1} parent=1 // pred_check
      _
    $region11: #{tpu_custom_call.1} parent=1 // pred_check_branch
      %23 = sbr.rel (0) target = $region13
    $region12: #{tpu_custom_call.1} parent=1 // pred_region
      _
    $region13: #{tpu_custom_call.1} parent=1 // pred_fallthru
      _
    // Predicated region
    $region14: #{tpu_custom_call.1} parent=1 // pred_check
      _
    $region15: #{tpu_custom_call.1} parent=1 // pred_check_branch
      %25 = sbr.rel (0) target = $region17
    $region16: #{tpu_custom_call.1} parent=1 // pred_region
      _
    $region17: #{tpu_custom_call.1} parent=1 // pred_fallthru
      _
    // Predicated region
    $region18: #{tpu_custom_call.1} parent=1 // pred_check
      _
    $region19: #{tpu_custom_call.1} parent=1 // pred_check_branch
      %27 = sbr.rel (0) target = $region21
    $region20: #{tpu_custom_call.1} parent=1 // pred_region
      _
    $region21: #{tpu_custom_call.1} parent=1 // pred_fallthru
      _
    // Predicated region
    $region22: #{tpu_custom_call.1} parent=1 // pred_check
      _
    $region23: #{tpu_custom_call.1} parent=1 // pred_check_branch
      %29 = sbr.rel (0) target = $region25
    $region24: #{tpu_custom_call.1} parent=1 // pred_region
      _
    $region25: #{tpu_custom_call.1} parent=1 // pred_fallthru
      _
    // Predicated region
    $region26: #{tpu_custom_call.1} parent=1 // pred_check
      _
    $region27: #{tpu_custom_call.1} parent=1 // pred_check_branch
      %31 = sbr.rel (0) target = $region29
    $region28: #{tpu_custom_call.1} parent=1 // pred_region
      _
    $region29: #{tpu_custom_call.1} parent=1 // pred_fallthru
      _
    // Predicated region
    $region30: #{tpu_custom_call.1} parent=1 // pred_check
      _
    $region31: #{tpu_custom_call.1} parent=1 // pred_check_branch
      %33 = sbr.rel (0) target = $region33
    $region32: #{tpu_custom_call.1} parent=1 // pred_region
      _
    $region33: #{tpu_custom_call.1} parent=1 // pred_fallthru
      _
    // Predicated region
    $region34: #{tpu_custom_call.1} parent=1 // pred_check
      _
    $region35: #{tpu_custom_call.1} parent=1 // pred_check_branch
      %35 = sbr.rel (0) target = $region37
    $region36: #{tpu_custom_call.1} parent=1 // pred_region
      _
    $region37: #{tpu_custom_call.1} parent=1 // pred_fallthru
      _
    %v37 = vld [vmem:[%s0] sm:$0xf]
    %v38 = vld [vmem:[%s0 + $0x4] sm:$0xf]
    %v39 = vld [vmem:[%s0 + $0x8] sm:$0xf]
    %v40 = vld [vmem:[%s0 + $0xc] sm:$0xf]
    %v41 = vld [vmem:[%s0 + $0x10] sm:$0xf]
    %v42 = vld [vmem:[%s0 + $0x14] sm:$0xf]
    %v43 = vld [vmem:[%s0 + $0x18] sm:$0xf]
    %v44 = vld [vmem:[%s0 + $0x1c] sm:$0xf]
    %v45 = vld [vmem:[%s5] sm:$0xf]
    %v46 = vld [vmem:[%s5 + $0x4] sm:$0xf]
    %v47 = vld [vmem:[%s5 + $0x8] sm:$0xf]
    %v48 = vld [vmem:[%s5 + $0xc] sm:$0xf]
    %v49 = vld [vmem:[%s6] sm:$0x1]
    %v51 = vlaneseq
    %v52 = vshrl.u32 %v51, 7
    %v53 = vsub.s32 0, %v52
    %v54 = vrot.slane %v49, %v53
    %v64 = vunpack.c.l.b16 %v37
    %v65 = vunpack.c.l.b16 %v38
    %v66 = vunpack.c.l.b16 %v39
    %v67 = vunpack.c.l.b16 %v40
    %v68 = vunpack.c.l.b16 %v41
    %v69 = vunpack.c.l.b16 %v42
    %v70 = vunpack.c.l.b16 %v43
    %v71 = vunpack.c.l.b16 %v44
    %v72 = vpack.c.b16 %v65, %v64
    %v73 = vpack.c.b16 %v67, %v66
    %v74 = vpack.c.b16 %v69, %v68
    %v75 = vpack.c.b16 %v71, %v70
    %v80 = vunpack.c.l.b16 %v45
    %v81 = vunpack.c.l.b16 %v46
    %v82 = vunpack.c.l.b16 %v47
    %v83 = vunpack.c.l.b16 %v48
    %v84 = vpack.c.b16 %v81, %v80
    %v85 = vpack.c.b16 %v83, %v82
    %vm88 = vcmask 261120
    %v90 = vsel %vm88, %v72, 0
    %v93 = vsel %vm88, %v73, 0
    %v96 = vsel %vm88, %v74, 0
    %v99 = vsel %vm88, %v75, 0
    %101 = vmatprep.subr.bf16.mxu0 0
    %102 = vmatpush1.bf16.msra.mxu0 %v84
    %103 = vmatprep.subr.bf16.mxu0 0
    %104 = vmatpush1.bf16.msra.mxu0 %v85
    %105 = vmatprep.subr.bf16.mxu0 0
    %106 = vmatpush1.bf16.msra.mxu0 0
    %107 = vmatprep.subr.bf16.mxu0 0
    %108 = vmatpush1.bf16.msra.mxu0 0
    %109 = vmatprep.subr.bf16.mxu0 0
    %110 = vmatpush1.bf16.msra.mxu0 0
    %111 = vmatprep.subr.bf16.mxu0 0
    %112 = vmatpush1.bf16.msra.mxu0 0
    %113 = vmatprep.subr.bf16.mxu0 0
    %114 = vmatpush1.bf16.msra.mxu0 0
    %115 = vmatprep.subr.bf16.mxu0 0
    %116 = vmatpush1.bf16.msra.mxu0 0
    %117 = vmatprep.subr.bf16.mxu0 0
    %118 = vmatpush1.bf16.msra.mxu0 0
    %119 = vmatprep.subr.bf16.mxu0 0
    %120 = vmatpush1.bf16.msra.mxu0 0
    %121 = vmatprep.subr.bf16.mxu0 0
    %122 = vmatpush1.bf16.msra.mxu0 0
    %123 = vmatprep.subr.bf16.mxu0 0
    %124 = vmatpush1.bf16.msra.mxu0 0
    %125 = vmatprep.subr.bf16.mxu0 0
    %126 = vmatpush1.bf16.msra.mxu0 0
    %127 = vmatprep.subr.bf16.mxu0 0
    %128 = vmatpush1.bf16.msra.mxu0 0
    %129 = vmatprep.subr.bf16.mxu0 0
    %130 = vmatpush1.bf16.msra.mxu0 0
    %131 = vmatprep.subr.bf16.mxu0 0
    %132 = vmatpush1.bf16.msra.mxu0 0
    %133 = vmatprep.mubr.bf16.mxu0 0
    %134 = vmatmul.mubr.bf16.gmra.mrb[0].mxu0 %v90
    %v135 = vpop.f32.mrb[0].mxu0
    %v136 = vadd.f32 %v54, %v135
    %v137 = vpop.f32.mrb[0].mxu0
    %v138 = vpop.f32.mrb[0].mxu0
    %v139 = vadd.f32 %v54, %v138
    %v140 = vpop.f32.mrb[0].mxu0
    %141 = vmatprep.mubr.bf16.mxu0 0
    %142 = vmatmul.mubr.bf16.gmra.mrb[0].mxu0 %v93
    %v143 = vpop.f32.mrb[0].mxu0
    %v144 = vadd.f32 %v54, %v143
    %v145 = vpop.f32.mrb[0].mxu0
    %v146 = vpop.f32.mrb[0].mxu0
    %v147 = vadd.f32 %v54, %v146
    %v148 = vpop.f32.mrb[0].mxu0
    %149 = vmatprep.mubr.bf16.mxu0 0
    %150 = vmatmul.mubr.bf16.gmra.mrb[0].mxu0 %v96
    %v151 = vpop.f32.mrb[0].mxu0
    %v152 = vadd.f32 %v54, %v151
    %v153 = vpop.f32.mrb[0].mxu0
    %v154 = vpop.f32.mrb[0].mxu0
    %v155 = vadd.f32 %v54, %v154
    %v156 = vpop.f32.mrb[0].mxu0
    %157 = vmatprep.mubr.bf16.mxu0 0
    %158 = vmatmul.mubr.bf16.gmra.mrb[0].mxu0 %v99
    %v159 = vpop.f32.mrb[0].mxu0
    %v160 = vadd.f32 %v54, %v159
    %v161 = vpop.f32.mrb[0].mxu0
    %v162 = vpop.f32.mrb[0].mxu0
    %v163 = vadd.f32 %v54, %v162
    %v164 = vpop.f32.mrb[0].mxu0
    %165 = vdwg.mxu0
    %v166 = vld [vmem:[%s1] sm:$0xf]
    %v167 = vld [vmem:[%s1 + $0x4] sm:$0xf]
    %v168 = vld [vmem:[%s1 + $0x8] sm:$0xf]
    %v169 = vld [vmem:[%s1 + $0xc] sm:$0xf]
    %v170 = vld [vmem:[%s1 + $0x10] sm:$0xf]
    %v171 = vld [vmem:[%s1 + $0x14] sm:$0xf]
    %v172 = vld [vmem:[%s1 + $0x18] sm:$0xf]
    %v173 = vld [vmem:[%s1 + $0x1c] sm:$0xf]
    %v174 = vld [vmem:[%s1 + $0x20] sm:$0xf]
    %v175 = vld [vmem:[%s1 + $0x24] sm:$0xf]
    %v176 = vld [vmem:[%s1 + $0x28] sm:$0xf]
    %v177 = vld [vmem:[%s1 + $0x2c] sm:$0xf]
    %v178 = vld [vmem:[%s1 + $0x30] sm:$0xf]
    %v179 = vld [vmem:[%s1 + $0x34] sm:$0xf]
    %v180 = vld [vmem:[%s1 + $0x38] sm:$0xf]
    %v181 = vld [vmem:[%s1 + $0x3c] sm:$0xf]
    %v182 = vld [vmem:[%s1 + $0x40] sm:$0xf]
    %v183 = vld [vmem:[%s1 + $0x44] sm:$0xf]
    %v184 = vld [vmem:[%s1 + $0x48] sm:$0xf]
    %v185 = vld [vmem:[%s1 + $0x4c] sm:$0xf]
    %v186 = vld [vmem:[%s1 + $0x50] sm:$0xf]
    %v187 = vld [vmem:[%s1 + $0x54] sm:$0xf]
    %v188 = vld [vmem:[%s1 + $0x58] sm:$0xf]
    %v189 = vld [vmem:[%s1 + $0x5c] sm:$0xf]
    %v190 = vld [vmem:[%s1 + $0x60] sm:$0xf]
    %v191 = vld [vmem:[%s1 + $0x64] sm:$0xf]
    %v192 = vld [vmem:[%s1 + $0x68] sm:$0xf]
    %v193 = vld [vmem:[%s1 + $0x6c] sm:$0xf]
    %v194 = vld [vmem:[%s1 + $0x70] sm:$0xf]
    %v195 = vld [vmem:[%s1 + $0x74] sm:$0xf]
    %v196 = vld [vmem:[%s1 + $0x78] sm:$0xf]
    %v197 = vld [vmem:[%s1 + $0x7c] sm:$0xf]
    %v198 = vld [vmem:[%s1 + $0x80] sm:$0xf]
    %v199 = vld [vmem:[%s1 + $0x84] sm:$0xf]
    %v200 = vld [vmem:[%s1 + $0x88] sm:$0xf]
    %v201 = vld [vmem:[%s1 + $0x8c] sm:$0xf]
    %v202 = vld [vmem:[%s1 + $0x90] sm:$0xf]
    %v203 = vld [vmem:[%s1 + $0x94] sm:$0xf]
    %v204 = vld [vmem:[%s1 + $0x98] sm:$0xf]
    %v205 = vld [vmem:[%s1 + $0x9c] sm:$0xf]
    %v206 = vld [vmem:[%s1 + $0xa0] sm:$0xf]
    %v207 = vld [vmem:[%s1 + $0xa4] sm:$0xf]
    %v208 = vld [vmem:[%s1 + $0xa8] sm:$0xf]
    %v209 = vld [vmem:[%s1 + $0xac] sm:$0xf]
    %v210 = vld [vmem:[%s1 + $0xb0] sm:$0xf]
    %v211 = vld [vmem:[%s1 + $0xb4] sm:$0xf]
    %v212 = vld [vmem:[%s1 + $0xb8] sm:$0xf]
    %v213 = vld [vmem:[%s1 + $0xbc] sm:$0xf]
    %v214 = vld [vmem:[%s1 + $0xc0] sm:$0xf]
    %v215 = vld [vmem:[%s1 + $0xc4] sm:$0xf]
    %v216 = vld [vmem:[%s1 + $0xc8] sm:$0xf]
    %v217 = vld [vmem:[%s1 + $0xcc] sm:$0xf]
    %v218 = vld [vmem:[%s1 + $0xd0] sm:$0xf]
    %v219 = vld [vmem:[%s1 + $0xd4] sm:$0xf]
    %v220 = vld [vmem:[%s1 + $0xd8] sm:$0xf]
    %v221 = vld [vmem:[%s1 + $0xdc] sm:$0xf]
    %v222 = vld [vmem:[%s1 + $0xe0] sm:$0xf]
    %v223 = vld [vmem:[%s1 + $0xe4] sm:$0xf]
    %v224 = vld [vmem:[%s1 + $0xe8] sm:$0xf]
    %v225 = vld [vmem:[%s1 + $0xec] sm:$0xf]
    %v226 = vld [vmem:[%s1 + $0xf0] sm:$0xf]
    %v227 = vld [vmem:[%s1 + $0xf4] sm:$0xf]
    %v228 = vld [vmem:[%s1 + $0xf8] sm:$0xf]
    %v229 = vld [vmem:[%s1 + $0xfc] sm:$0xf]
    %v230 = vld [vmem:[%s1 + $0x100] sm:$0xf]
    %v231 = vld [vmem:[%s1 + $0x104] sm:$0xf]
    %v232 = vld [vmem:[%s1 + $0x108] sm:$0xf]
    %v233 = vld [vmem:[%s1 + $0x10c] sm:$0xf]
    %v234 = vld [vmem:[%s1 + $0x110] sm:$0xf]
    %v235 = vld [vmem:[%s1 + $0x114] sm:$0xf]
    %v236 = vld [vmem:[%s1 + $0x118] sm:$0xf]
    %v237 = vld [vmem:[%s1 + $0x11c] sm:$0xf]
    %v238 = vld [vmem:[%s1 + $0x120] sm:$0xf]
    %v239 = vld [vmem:[%s1 + $0x124] sm:$0xf]
    %v240 = vld [vmem:[%s1 + $0x128] sm:$0xf]
    %v241 = vld [vmem:[%s1 + $0x12c] sm:$0xf]
    %v242 = vld [vmem:[%s1 + $0x130] sm:$0xf]
    %v243 = vld [vmem:[%s1 + $0x134] sm:$0xf]
    %v244 = vld [vmem:[%s1 + $0x138] sm:$0xf]
    %v245 = vld [vmem:[%s1 + $0x13c] sm:$0xf]
    %v246 = vld [vmem:[%s1 + $0x140] sm:$0xf]
    %v247 = vld [vmem:[%s1 + $0x144] sm:$0xf]
    %v248 = vld [vmem:[%s1 + $0x148] sm:$0xf]
    %v249 = vld [vmem:[%s1 + $0x14c] sm:$0xf]
    %v250 = vld [vmem:[%s1 + $0x150] sm:$0xf]
    %v251 = vld [vmem:[%s1 + $0x154] sm:$0xf]
    %v252 = vld [vmem:[%s1 + $0x158] sm:$0xf]
    %v253 = vld [vmem:[%s1 + $0x15c] sm:$0xf]
    %v254 = vld [vmem:[%s1 + $0x160] sm:$0xf]
    %v255 = vld [vmem:[%s1 + $0x164] sm:$0xf]
    %v256 = vld [vmem:[%s1 + $0x168] sm:$0xf]
    %v257 = vld [vmem:[%s1 + $0x16c] sm:$0xf]
    %v258 = vld [vmem:[%s1 + $0x170] sm:$0xf]
    %v259 = vld [vmem:[%s1 + $0x174] sm:$0xf]
    %v260 = vld [vmem:[%s1 + $0x178] sm:$0xf]
    %v261 = vld [vmem:[%s1 + $0x17c] sm:$0xf]
    %v262 = vld [vmem:[%s1 + $0x180] sm:$0xf]
    %v263 = vld [vmem:[%s1 + $0x184] sm:$0xf]
    %v264 = vld [vmem:[%s1 + $0x188] sm:$0xf]
    %v265 = vld [vmem:[%s1 + $0x18c] sm:$0xf]
    %v266 = vld [vmem:[%s1 + $0x190] sm:$0xf]
    %v267 = vld [vmem:[%s1 + $0x194] sm:$0xf]
    %v268 = vld [vmem:[%s1 + $0x198] sm:$0xf]
    %v269 = vld [vmem:[%s1 + $0x19c] sm:$0xf]
    %v270 = vld [vmem:[%s1 + $0x1a0] sm:$0xf]
    %v271 = vld [vmem:[%s1 + $0x1a4] sm:$0xf]
    %v272 = vld [vmem:[%s1 + $0x1a8] sm:$0xf]
    %v273 = vld [vmem:[%s1 + $0x1ac] sm:$0xf]
    %v274 = vld [vmem:[%s1 + $0x1b0] sm:$0xf]
    %v275 = vld [vmem:[%s1 + $0x1b4] sm:$0xf]
    %v276 = vld [vmem:[%s1 + $0x1b8] sm:$0xf]
    %v277 = vld [vmem:[%s1 + $0x1bc] sm:$0xf]
    %v278 = vld [vmem:[%s1 + $0x1c0] sm:$0xf]
    %v279 = vld [vmem:[%s1 + $0x1c4] sm:$0xf]
    %v280 = vld [vmem:[%s1 + $0x1c8] sm:$0xf]
    %v281 = vld [vmem:[%s1 + $0x1cc] sm:$0xf]
    %v282 = vld [vmem:[%s1 + $0x1d0] sm:$0xf]
    %v283 = vld [vmem:[%s1 + $0x1d4] sm:$0xf]
    %v284 = vld [vmem:[%s1 + $0x1d8] sm:$0xf]
    %v285 = vld [vmem:[%s1 + $0x1dc] sm:$0xf]
    %v286 = vld [vmem:[%s1 + $0x1e0] sm:$0xf]
    %v287 = vld [vmem:[%s1 + $0x1e4] sm:$0xf]
    %v288 = vld [vmem:[%s1 + $0x1e8] sm:$0xf]
    %v289 = vld [vmem:[%s1 + $0x1ec] sm:$0xf]
    %v290 = vld [vmem:[%s1 + $0x1f0] sm:$0xf]
    %v291 = vld [vmem:[%s1 + $0x1f4] sm:$0xf]
    %v292 = vld [vmem:[%s1 + $0x1f8] sm:$0xf]
    %v293 = vld [vmem:[%s1 + $0x1fc] sm:$0xf]
    %v294 = vld [vmem:[%s7] sm:$0xf]
    %v295 = vld [vmem:[%s7 + $0x4] sm:$0xf]
    %v296 = vld [vmem:[%s7 + $0x8] sm:$0xf]
    %v297 = vld [vmem:[%s7 + $0xc] sm:$0xf]
    %v298 = vld [vmem:[%s8] sm:$0x1]
    %v300 = vlaneseq
    %v301 = vshrl.u32 %v300, 7
    %v302 = vsub.s32 0, %v301
    %v303 = vrot.slane %v298, %v302
    %v433 = vunpack.c.l.b16 %v166
    %v434 = vunpack.c.l.b16 %v167
    %v435 = vunpack.c.l.b16 %v168
    %v436 = vunpack.c.l.b16 %v169
    %v437 = vunpack.c.l.b16 %v170
    %v438 = vunpack.c.l.b16 %v171
    %v439 = vunpack.c.l.b16 %v172
    %v440 = vunpack.c.l.b16 %v173
    %v441 = vunpack.c.l.b16 %v174
    %v442 = vunpack.c.l.b16 %v175
    %v443 = vunpack.c.l.b16 %v176
    %v444 = vunpack.c.l.b16 %v177
    %v445 = vunpack.c.l.b16 %v178
    %v446 = vunpack.c.l.b16 %v179
    %v447 = vunpack.c.l.b16 %v180
    %v448 = vunpack.c.l.b16 %v181
    %v449 = vunpack.c.l.b16 %v182
    %v450 = vunpack.c.l.b16 %v183
    %v451 = vunpack.c.l.b16 %v184
    %v452 = vunpack.c.l.b16 %v185
    %v453 = vunpack.c.l.b16 %v186
    %v454 = vunpack.c.l.b16 %v187
    %v455 = vunpack.c.l.b16 %v188
    %v456 = vunpack.c.l.b16 %v189
    %v457 = vunpack.c.l.b16 %v190
    %v458 = vunpack.c.l.b16 %v191
    %v459 = vunpack.c.l.b16 %v192
    %v460 = vunpack.c.l.b16 %v193
    %v461 = vunpack.c.l.b16 %v194
    %v462 = vunpack.c.l.b16 %v195
    %v463 = vunpack.c.l.b16 %v196
    %v464 = vunpack.c.l.b16 %v197
    %v465 = vunpack.c.l.b16 %v198
    %v466 = vunpack.c.l.b16 %v199
    %v467 = vunpack.c.l.b16 %v200
    %v468 = vunpack.c.l.b16 %v201
    %v469 = vunpack.c.l.b16 %v202
    %v470 = vunpack.c.l.b16 %v203
    %v471 = vunpack.c.l.b16 %v204
    %v472 = vunpack.c.l.b16 %v205
    %v473 = vunpack.c.l.b16 %v206
    %v474 = vunpack.c.l.b16 %v207
    %v475 = vunpack.c.l.b16 %v208
    %v476 = vunpack.c.l.b16 %v209
    %v477 = vunpack.c.l.b16 %v210
    %v478 = vunpack.c.l.b16 %v211
    %v479 = vunpack.c.l.b16 %v212
    %v480 = vunpack.c.l.b16 %v213
    %v481 = vunpack.c.l.b16 %v214
    %v482 = vunpack.c.l.b16 %v215
    %v483 = vunpack.c.l.b16 %v216
    %v484 = vunpack.c.l.b16 %v217
    %v485 = vunpack.c.l.b16 %v218
    %v486 = vunpack.c.l.b16 %v219
    %v487 = vunpack.c.l.b16 %v220
    %v488 = vunpack.c.l.b16 %v221
    %v489 = vunpack.c.l.b16 %v222
    %v490 = vunpack.c.l.b16 %v223
    %v491 = vunpack.c.l.b16 %v224
    %v492 = vunpack.c.l.b16 %v225
    %v493 = vunpack.c.l.b16 %v226
    %v494 = vunpack.c.l.b16 %v227
    %v495 = vunpack.c.l.b16 %v228
    %v496 = vunpack.c.l.b16 %v229
    %v497 = vunpack.c.l.b16 %v230
    %v498 = vunpack.c.l.b16 %v231
    %v499 = vunpack.c.l.b16 %v232
    %v500 = vunpack.c.l.b16 %v233
    %v501 = vunpack.c.l.b16 %v234
    %v502 = vunpack.c.l.b16 %v235
    %v503 = vunpack.c.l.b16 %v236
    %v504 = vunpack.c.l.b16 %v237
    %v505 = vunpack.c.l.b16 %v238
    %v506 = vunpack.c.l.b16 %v239
    %v507 = vunpack.c.l.b16 %v240
    %v508 = vunpack.c.l.b16 %v241
    %v509 = vunpack.c.l.b16 %v242
    %v510 = vunpack.c.l.b16 %v243
    %v511 = vunpack.c.l.b16 %v244
    %v512 = vunpack.c.l.b16 %v245
    %v513 = vunpack.c.l.b16 %v246
    %v514 = vunpack.c.l.b16 %v247
    %v515 = vunpack.c.l.b16 %v248
    %v516 = vunpack.c.l.b16 %v249
    %v517 = vunpack.c.l.b16 %v250
    %v518 = vunpack.c.l.b16 %v251
    %v519 = vunpack.c.l.b16 %v252
    %v520 = vunpack.c.l.b16 %v253
    %v521 = vunpack.c.l.b16 %v254
    %v522 = vunpack.c.l.b16 %v255
    %v523 = vunpack.c.l.b16 %v256
    %v524 = vunpack.c.l.b16 %v257
    %v525 = vunpack.c.l.b16 %v258
    %v526 = vunpack.c.l.b16 %v259
    %v527 = vunpack.c.l.b16 %v260
    %v528 = vunpack.c.l.b16 %v261
    %v529 = vunpack.c.l.b16 %v262
    %v530 = vunpack.c.l.b16 %v263
    %v531 = vunpack.c.l.b16 %v264
    %v532 = vunpack.c.l.b16 %v265
    %v533 = vunpack.c.l.b16 %v266
    %v534 = vunpack.c.l.b16 %v267
    %v535 = vunpack.c.l.b16 %v268
    %v536 = vunpack.c.l.b16 %v269
    %v537 = vunpack.c.l.b16 %v270
    %v538 = vunpack.c.l.b16 %v271
    %v539 = vunpack.c.l.b16 %v272
    %v540 = vunpack.c.l.b16 %v273
    %v541 = vunpack.c.l.b16 %v274
    %v542 = vunpack.c.l.b16 %v275
    %v543 = vunpack.c.l.b16 %v276
    %v544 = vunpack.c.l.b16 %v277
    %v545 = vunpack.c.l.b16 %v278
    %v546 = vunpack.c.l.b16 %v279
    %v547 = vunpack.c.l.b16 %v280
    %v548 = vunpack.c.l.b16 %v281
    %v549 = vunpack.c.l.b16 %v282
    %v550 = vunpack.c.l.b16 %v283
    %v551 = vunpack.c.l.b16 %v284
    %v552 = vunpack.c.l.b16 %v285
    %v553 = vunpack.c.l.b16 %v286
    %v554 = vunpack.c.l.b16 %v287
    %v555 = vunpack.c.l.b16 %v288
    %v556 = vunpack.c.l.b16 %v289
    %v557 = vunpack.c.l.b16 %v290
    %v558 = vunpack.c.l.b16 %v291
    %v559 = vunpack.c.l.b16 %v292
    %v560 = vunpack.c.l.b16 %v293
    %v561 = vpack.c.b16 %v434, %v433
    %v562 = vpack.c.b16 %v436, %v435
    %v563 = vpack.c.b16 %v438, %v437
    %v564 = vpack.c.b16 %v440, %v439
    %v565 = vpack.c.b16 %v442, %v441
    %v566 = vpack.c.b16 %v444, %v443
    %v567 = vpack.c.b16 %v446, %v445
    %v568 = vpack.c.b16 %v448, %v447
    %v569 = vpack.c.b16 %v450, %v449
    %v570 = vpack.c.b16 %v452, %v451
    %v571 = vpack.c.b16 %v454, %v453
    %v572 = vpack.c.b16 %v456, %v455
    %v573 = vpack.c.b16 %v458, %v457
    %v574 = vpack.c.b16 %v460, %v459
    %v575 = vpack.c.b16 %v462, %v461
    %v576 = vpack.c.b16 %v464, %v463
    %v577 = vpack.c.b16 %v466, %v465
    %v578 = vpack.c.b16 %v468, %v467
    %v579 = vpack.c.b16 %v470, %v469
    %v580 = vpack.c.b16 %v472, %v471
    %v581 = vpack.c.b16 %v474, %v473
    %v582 = vpack.c.b16 %v476, %v475
    %v583 = vpack.c.b16 %v478, %v477
    %v584 = vpack.c.b16 %v480, %v479
    %v585 = vpack.c.b16 %v482, %v481
    %v586 = vpack.c.b16 %v484, %v483
    %v587 = vpack.c.b16 %v486, %v485
    %v588 = vpack.c.b16 %v488, %v487
    %v589 = vpack.c.b16 %v490, %v489
    %v590 = vpack.c.b16 %v492, %v491
    %v591 = vpack.c.b16 %v494, %v493
    %v592 = vpack.c.b16 %v496, %v495
    %v593 = vpack.c.b16 %v498, %v497
    %v594 = vpack.c.b16 %v500, %v499
    %v595 = vpack.c.b16 %v502, %v501
    %v596 = vpack.c.b16 %v504, %v503
    %v597 = vpack.c.b16 %v506, %v505
    %v598 = vpack.c.b16 %v508, %v507
    %v599 = vpack.c.b16 %v510, %v509
    %v600 = vpack.c.b16 %v512, %v511
    %v601 = vpack.c.b16 %v514, %v513
    %v602 = vpack.c.b16 %v516, %v515
    %v603 = vpack.c.b16 %v518, %v517
    %v604 = vpack.c.b16 %v520, %v519
    %v605 = vpack.c.b16 %v522, %v521
    %v606 = vpack.c.b16 %v524, %v523
    %v607 = vpack.c.b16 %v526, %v525
    %v608 = vpack.c.b16 %v528, %v527
    %v609 = vpack.c.b16 %v530, %v529
    %v610 = vpack.c.b16 %v532, %v531
    %v611 = vpack.c.b16 %v534, %v533
    %v612 = vpack.c.b16 %v536, %v535
    %v613 = vpack.c.b16 %v538, %v537
    %v614 = vpack.c.b16 %v540, %v539
    %v615 = vpack.c.b16 %v542, %v541
    %v616 = vpack.c.b16 %v544, %v543
    %v617 = vpack.c.b16 %v546, %v545
    %v618 = vpack.c.b16 %v548, %v547
    %v619 = vpack.c.b16 %v550, %v549
    %v620 = vpack.c.b16 %v552, %v551
    %v621 = vpack.c.b16 %v554, %v553
    %v622 = vpack.c.b16 %v556, %v555
    %v623 = vpack.c.b16 %v558, %v557
    %v624 = vpack.c.b16 %v560, %v559
    %v629 = vunpack.c.l.b16 %v294
    %v630 = vunpack.c.l.b16 %v295
    %v631 = vunpack.c.l.b16 %v296
    %v632 = vunpack.c.l.b16 %v297
    %v633 = vpack.c.b16 %v630, %v629
    %v634 = vpack.c.b16 %v632, %v631
    %v638 = vsel %vm88, %v561, 0
    %v641 = vsel %vm88, %v562, 0
    %v644 = vsel %vm88, %v563, 0
    %v647 = vsel %vm88, %v564, 0
    %v650 = vsel %vm88, %v565, 0
    %v653 = vsel %vm88, %v566, 0
    %v656 = vsel %vm88, %v567, 0
    %v659 = vsel %vm88, %v568, 0
    %v662 = vsel %vm88, %v569, 0
    %v665 = vsel %vm88, %v570, 0
    %v668 = vsel %vm88, %v571, 0
    %v671 = vsel %vm88, %v572, 0
    %v674 = vsel %vm88, %v573, 0
    %v677 = vsel %vm88, %v574, 0
    %v680 = vsel %vm88, %v575, 0
    %v683 = vsel %vm88, %v576, 0
    %v686 = vsel %vm88, %v577, 0
    %v689 = vsel %vm88, %v578, 0
    %v692 = vsel %vm88, %v579, 0
    %v695 = vsel %vm88, %v580, 0
    %v698 = vsel %vm88, %v581, 0
    %v701 = vsel %vm88, %v582, 0
    %v704 = vsel %vm88, %v583, 0
    %v707 = vsel %vm88, %v584, 0
    %v710 = vsel %vm88, %v585, 0
    %v713 = vsel %vm88, %v586, 0
    %v716 = vsel %vm88, %v587, 0
    %v719 = vsel %vm88, %v588, 0
    %v722 = vsel %vm88, %v589, 0
    %v725 = vsel %vm88, %v590, 0
    %v728 = vsel %vm88, %v591, 0
    %v731 = vsel %vm88, %v592, 0
    %v734 = vsel %vm88, %v593, 0
    %v737 = vsel %vm88, %v594, 0
    %v740 = vsel %vm88, %v595, 0
    %v743 = vsel %vm88, %v596, 0
    %v746 = vsel %vm88, %v597, 0
    %v749 = vsel %vm88, %v598, 0
    %v752 = vsel %vm88, %v599, 0
    %v755 = vsel %vm88, %v600, 0
    %v758 = vsel %vm88, %v601, 0
    %v761 = vsel %vm88, %v602, 0
    %v764 = vsel %vm88, %v603, 0
    %v767 = vsel %vm88, %v604, 0
    %v770 = vsel %vm88, %v605, 0
    %v773 = vsel %vm88, %v606, 0
    %v776 = vsel %vm88, %v607, 0
    %v779 = vsel %vm88, %v608, 0
    %v782 = vsel %vm88, %v609, 0
    %v785 = vsel %vm88, %v610, 0
    %v788 = vsel %vm88, %v611, 0
    %v791 = vsel %vm88, %v612, 0
    %v794 = vsel %vm88, %v613, 0
    %v797 = vsel %vm88, %v614, 0
    %v800 = vsel %vm88, %v615, 0
    %v803 = vsel %vm88, %v616, 0
    %v806 = vsel %vm88, %v617, 0
    %v809 = vsel %vm88, %v618, 0
    %v812 = vsel %vm88, %v619, 0
    %v815 = vsel %vm88, %v620, 0
    %v818 = vsel %vm88, %v621, 0
    %v821 = vsel %vm88, %v622, 0
    %v824 = vsel %vm88, %v623, 0
    %v827 = vsel %vm88, %v624, 0
    %829 = vmatprep.subr.bf16.mxu0 0
    %830 = vmatpush1.bf16.msra.mxu0 %v633
    %831 = vmatprep.subr.bf16.mxu0 0
    %832 = vmatpush1.bf16.msra.mxu0 %v634
    %833 = vmatprep.subr.bf16.mxu0 0
    %834 = vmatpush1.bf16.msra.mxu0 0
    %835 = vmatprep.subr.bf16.mxu0 0
    %836 = vmatpush1.bf16.msra.mxu0 0
    %837 = vmatprep.subr.bf16.mxu0 0
    %838 = vmatpush1.bf16.msra.mxu0 0
    %839 = vmatprep.subr.bf16.mxu0 0
    %840 = vmatpush1.bf16.msra.mxu0 0
    %841 = vmatprep.subr.bf16.mxu0 0
    %842 = vmatpush1.bf16.msra.mxu0 0
    %843 = vmatprep.subr.bf16.mxu0 0
    %844 = vmatpush1.bf16.msra.mxu0 0
    %845 = vmatprep.subr.bf16.mxu0 0
    %846 = vmatpush1.bf16.msra.mxu0 0
    %847 = vmatprep.subr.bf16.mxu0 0
    %848 = vmatpush1.bf16.msra.mxu0 0
    %849 = vmatprep.subr.bf16.mxu0 0
    %850 = vmatpush1.bf16.msra.mxu0 0
    %851 = vmatprep.subr.bf16.mxu0 0
    %852 = vmatpush1.bf16.msra.mxu0 0
    %853 = vmatprep.subr.bf16.mxu0 0
    %854 = vmatpush1.bf16.msra.mxu0 0
    %855 = vmatprep.subr.bf16.mxu0 0
    %856 = vmatpush1.bf16.msra.mxu0 0
    %857 = vmatprep.subr.bf16.mxu0 0
    %858 = vmatpush1.bf16.msra.mxu0 0
    %859 = vmatprep.subr.bf16.mxu0 0
    %860 = vmatpush1.bf16.msra.mxu0 0
    %861 = vmatprep.mubr.bf16.mxu0 0
    %862 = vmatmul.mubr.bf16.gmra.mrb[0].mxu0 %v638
    %v863 = vpop.f32.mrb[0].mxu0
    %v864 = vadd.f32 %v303, %v863
    %v865 = vpop.f32.mrb[0].mxu0
    %v866 = vpop.f32.mrb[0].mxu0
    %v867 = vadd.f32 %v303, %v866
    %v868 = vpop.f32.mrb[0].mxu0
    %869 = vmatprep.mubr.bf16.mxu0 0
    %870 = vmatmul.mubr.bf16.gmra.mrb[0].mxu0 %v641
    %v871 = vpop.f32.mrb[0].mxu0
    %v872 = vadd.f32 %v303, %v871
    %v873 = vpop.f32.mrb[0].mxu0
    %v874 = vpop.f32.mrb[0].mxu0
    %v875 = vadd.f32 %v303, %v874
    %v876 = vpop.f32.mrb[0].mxu0
    %877 = vmatprep.mubr.bf16.mxu0 0
    %878 = vmatmul.mubr.bf16.gmra.mrb[0].mxu0 %v644
    %v879 = vpop.f32.mrb[0].mxu0
    %v880 = vadd.f32 %v303, %v879
    %v881 = vpop.f32.mrb[0].mxu0
    %v882 = vpop.f32.mrb[0].mxu0
    %v883 = vadd.f32 %v303, %v882
    %v884 = vpop.f32.mrb[0].mxu0
    %885 = vmatprep.mubr.bf16.mxu0 0
    %886 = vmatmul.mubr.bf16.gmra.mrb[0].mxu0 %v647
    %v887 = vpop.f32.mrb[0].mxu0
    %v888 = vadd.f32 %v303, %v887
    %v889 = vpop.f32.mrb[0].mxu0
    %v890 = vpop.f32.mrb[0].mxu0
    %v891 = vadd.f32 %v303, %v890
    %v892 = vpop.f32.mrb[0].mxu0
    %893 = vmatprep.mubr.bf16.mxu0 0
    %894 = vmatmul.mubr.bf16.gmra.mrb[0].mxu0 %v650
    %v895 = vpop.f32.mrb[0].mxu0
    %v896 = vadd.f32 %v303, %v895
    %v897 = vpop.f32.mrb[0].mxu0
    %v898 = vpop.f32.mrb[0].mxu0
    %v899 = vadd.f32 %v303, %v898
    %v900 = vpop.f32.mrb[0].mxu0
    %901 = vmatprep.mubr.bf16.mxu0 0
    %902 = vmatmul.mubr.bf16.gmra.mrb[0].mxu0 %v653
    %v903 = vpop.f32.mrb[0].mxu0
    %v904 = vadd.f32 %v303, %v903
    %v905 = vpop.f32.mrb[0].mxu0
    %v906 = vpop.f32.mrb[0].mxu0
    %v907 = vadd.f32 %v303, %v906
    %v908 = vpop.f32.mrb[0].mxu0
    %909 = vmatprep.mubr.bf16.mxu0 0
    %910 = vmatmul.mubr.bf16.gmra.mrb[0].mxu0 %v656
    %v911 = vpop.f32.mrb[0].mxu0
    %v912 = vadd.f32 %v303, %v911
    %v913 = vpop.f32.mrb[0].mxu0
    %v914 = vpop.f32.mrb[0].mxu0
    %v915 = vadd.f32 %v303, %v914
    %v916 = vpop.f32.mrb[0].mxu0
    %917 = vmatprep.mubr.bf16.mxu0 0
    %918 = vmatmul.mubr.bf16.gmra.mrb[0].mxu0 %v659
    %v919 = vpop.f32.mrb[0].mxu0
    %v920 = vadd.f32 %v303, %v919
    %v921 = vpop.f32.mrb[0].mxu0
    %v922 = vpop.f32.mrb[0].mxu0
    %v923 = vadd.f32 %v303, %v922
    %v924 = vpop.f32.mrb[0].mxu0
    %925 = vmatprep.mubr.bf16.mxu0 0
    %926 = vmatmul.mubr.bf16.gmra.mrb[0].mxu0 %v662
    %v927 = vpop.f32.mrb[0].mxu0
    %v928 = vadd.f32 %v303, %v927
    %v929 = vpop.f32.mrb[0].mxu0
    %v930 = vpop.f32.mrb[0].mxu0
    %v931 = vadd.f32 %v303, %v930
    %v932 = vpop.f32.mrb[0].mxu0
    %933 = vmatprep.mubr.bf16.mxu0 0
    %934 = vmatmul.mubr.bf16.gmra.mrb[0].mxu0 %v665
    %v935 = vpop.f32.mrb[0].mxu0
    %v936 = vadd.f32 %v303, %v935
    %v937 = vpop.f32.mrb[0].mxu0
    %v938 = vpop.f32.mrb[0].mxu0
    %v939 = vadd.f32 %v303, %v938
    %v940 = vpop.f32.mrb[0].mxu0
    %941 = vmatprep.mubr.bf16.mxu0 0
    %942 = vmatmul.mubr.bf16.gmra.mrb[0].mxu0 %v668
    %v943 = vpop.f32.mrb[0].mxu0
    %v944 = vadd.f32 %v303, %v943
    %v945 = vpop.f32.mrb[0].mxu0
    %v946 = vpop.f32.mrb[0].mxu0
    %v947 = vadd.f32 %v303, %v946
    %v948 = vpop.f32.mrb[0].mxu0
    %949 = vmatprep.mubr.bf16.mxu0 0
    %950 = vmatmul.mubr.bf16.gmra.mrb[0].mxu0 %v671
    %v951 = vpop.f32.mrb[0].mxu0
    %v952 = vadd.f32 %v303, %v951
    %v953 = vpop.f32.mrb[0].mxu0
    %v954 = vpop.f32.mrb[0].mxu0
    %v955 = vadd.f32 %v303, %v954
    %v956 = vpop.f32.mrb[0].mxu0
    %957 = vmatprep.mubr.bf16.mxu0 0
    %958 = vmatmul.mubr.bf16.gmra.mrb[0].mxu0 %v674
    %v959 = vpop.f32.mrb[0].mxu0
    %v960 = vadd.f32 %v303, %v959
    %v961 = vpop.f32.mrb[0].mxu0
    %v962 = vpop.f32.mrb[0].mxu0
    %v963 = vadd.f32 %v303, %v962
    %v964 = vpop.f32.mrb[0].mxu0
    %965 = vmatprep.mubr.bf16.mxu0 0
    %966 = vmatmul.mubr.bf16.gmra.mrb[0].mxu0 %v677
    %v967 = vpop.f32.mrb[0].mxu0
    %v968 = vadd.f32 %v303, %v967
    %v969 = vpop.f32.mrb[0].mxu0
    %v970 = vpop.f32.mrb[0].mxu0
    %v971 = vadd.f32 %v303, %v970
    %v972 = vpop.f32.mrb[0].mxu0
    %973 = vmatprep.mubr.bf16.mxu0 0
    %974 = vmatmul.mubr.bf16.gmra.mrb[0].mxu0 %v680
    %v975 = vpop.f32.mrb[0].mxu0
    %v976 = vadd.f32 %v303, %v975
    %v977 = vpop.f32.mrb[0].mxu0
    %v978 = vpop.f32.mrb[0].mxu0
    %v979 = vadd.f32 %v303, %v978
    %v980 = vpop.f32.mrb[0].mxu0
    %981 = vmatprep.mubr.bf16.mxu0 0
    %982 = vmatmul.mubr.bf16.gmra.mrb[0].mxu0 %v683
    %v983 = vpop.f32.mrb[0].mxu0
    %v984 = vadd.f32 %v303, %v983
    %v985 = vpop.f32.mrb[0].mxu0
    %v986 = vpop.f32.mrb[0].mxu0
    %v987 = vadd.f32 %v303, %v986
    %v988 = vpop.f32.mrb[0].mxu0
    %989 = vmatprep.mubr.bf16.mxu0 0
    %990 = vmatmul.mubr.bf16.gmra.mrb[0].mxu0 %v686
    %v991 = vpop.f32.mrb[0].mxu0
    %v992 = vadd.f32 %v303, %v991
    %v993 = vpop.f32.mrb[0].mxu0
    %v994 = vpop.f32.mrb[0].mxu0
    %v995 = vadd.f32 %v303, %v994
    %v996 = vpop.f32.mrb[0].mxu0
    %997 = vmatprep.mubr.bf16.mxu0 0
    %998 = vmatmul.mubr.bf16.gmra.mrb[0].mxu0 %v689
    %v999 = vpop.f32.mrb[0].mxu0
    %v1000 = vadd.f32 %v303, %v999
    %v1001 = vpop.f32.mrb[0].mxu0
    %v1002 = vpop.f32.mrb[0].mxu0
    %v1003 = vadd.f32 %v303, %v1002
    %v1004 = vpop.f32.mrb[0].mxu0
    %1005 = vmatprep.mubr.bf16.mxu0 0
    %1006 = vmatmul.mubr.bf16.gmra.mrb[0].mxu0 %v692
    %v1007 = vpop.f32.mrb[0].mxu0
    %v1008 = vadd.f32 %v303, %v1007
    %v1009 = vpop.f32.mrb[0].mxu0
    %v1010 = vpop.f32.mrb[0].mxu0
    %v1011 = vadd.f32 %v303, %v1010
    %v1012 = vpop.f32.mrb[0].mxu0
    %1013 = vmatprep.mubr.bf16.mxu0 0
    %1014 = vmatmul.mubr.bf16.gmra.mrb[0].mxu0 %v695
    %v1015 = vpop.f32.mrb[0].mxu0
    %v1016 = vadd.f32 %v303, %v1015
    %v1017 = vpop.f32.mrb[0].mxu0
    %v1018 = vpop.f32.mrb[0].mxu0
    %v1019 = vadd.f32 %v303, %v1018
    %v1020 = vpop.f32.mrb[0].mxu0
    %1021 = vmatprep.mubr.bf16.mxu0 0
    %1022 = vmatmul.mubr.bf16.gmra.mrb[0].mxu0 %v698
    %v1023 = vpop.f32.mrb[0].mxu0
    %v1024 = vadd.f32 %v303, %v1023
    %v1025 = vpop.f32.mrb[0].mxu0
    %v1026 = vpop.f32.mrb[0].mxu0
    %v1027 = vadd.f32 %v303, %v1026
    %v1028 = vpop.f32.mrb[0].mxu0
    %1029 = vmatprep.mubr.bf16.mxu0 0
    %1030 = vmatmul.mubr.bf16.gmra.mrb[0].mxu0 %v701
    %v1031 = vpop.f32.mrb[0].mxu0
    %v1032 = vadd.f32 %v303, %v1031
    %v1033 = vpop.f32.mrb[0].mxu0
    %v1034 = vpop.f32.mrb[0].mxu0
    %v1035 = vadd.f32 %v303, %v1034
    %v1036 = vpop.f32.mrb[0].mxu0
    %1037 = vmatprep.mubr.bf16.mxu0 0
    %1038 = vmatmul.mubr.bf16.gmra.mrb[0].mxu0 %v704
    %v1039 = vpop.f32.mrb[0].mxu0
    %v1040 = vadd.f32 %v303, %v1039
    %v1041 = vpop.f32.mrb[0].mxu0
    %v1042 = vpop.f32.mrb[0].mxu0
    %v1043 = vadd.f32 %v303, %v1042
    %v1044 = vpop.f32.mrb[0].mxu0
    %1045 = vmatprep.mubr.bf16.mxu0 0
    %1046 = vmatmul.mubr.bf16.gmra.mrb[0].mxu0 %v707
    %v1047 = vpop.f32.mrb[0].mxu0
    %v1048 = vadd.f32 %v303, %v1047
    %v1049 = vpop.f32.mrb[0].mxu0
    %v1050 = vpop.f32.mrb[0].mxu0
    %v1051 = vadd.f32 %v303, %v1050
    %v1052 = vpop.f32.mrb[0].mxu0
    %1053 = vmatprep.mubr.bf16.mxu0 0
    %1054 = vmatmul.mubr.bf16.gmra.mrb[0].mxu0 %v710
    %v1055 = vpop.f32.mrb[0].mxu0
    %v1056 = vadd.f32 %v303, %v1055
    %v1057 = vpop.f32.mrb[0].mxu0
    %v1058 = vpop.f32.mrb[0].mxu0
    %v1059 = vadd.f32 %v303, %v1058
    %v1060 = vpop.f32.mrb[0].mxu0
    %1061 = vmatprep.mubr.bf16.mxu0 0
    %1062 = vmatmul.mubr.bf16.gmra.mrb[0].mxu0 %v713
    %v1063 = vpop.f32.mrb[0].mxu0
    %v1064 = vadd.f32 %v303, %v1063
    %v1065 = vpop.f32.mrb[0].mxu0
    %v1066 = vpop.f32.mrb[0].mxu0
    %v1067 = vadd.f32 %v303, %v1066
    %v1068 = vpop.f32.mrb[0].mxu0
    %1069 = vmatprep.mubr.bf16.mxu0 0
    %1070 = vmatmul.mubr.bf16.gmra.mrb[0].mxu0 %v716
    %v1071 = vpop.f32.mrb[0].mxu0
    %v1072 = vadd.f32 %v303, %v1071
    %v1073 = vpop.f32.mrb[0].mxu0
    %v1074 = vpop.f32.mrb[0].mxu0
    %v1075 = vadd.f32 %v303, %v1074
    %v1076 = vpop.f32.mrb[0].mxu0
    %1077 = vmatprep.mubr.bf16.mxu0 0
    %1078 = vmatmul.mubr.bf16.gmra.mrb[0].mxu0 %v719
    %v1079 = vpop.f32.mrb[0].mxu0
    %v1080 = vadd.f32 %v303, %v1079
    %v1081 = vpop.f32.mrb[0].mxu0
    %v1082 = vpop.f32.mrb[0].mxu0
    %v1083 = vadd.f32 %v303, %v1082
    %v1084 = vpop.f32.mrb[0].mxu0
    %1085 = vmatprep.mubr.bf16.mxu0 0
    %1086 = vmatmul.mubr.bf16.gmra.mrb[0].mxu0 %v722
    %v1087 = vpop.f32.mrb[0].mxu0
    %v1088 = vadd.f32 %v303, %v1087
    %v1089 = vpop.f32.mrb[0].mxu0
    %v1090 = vpop.f32.mrb[0].mxu0
    %v1091 = vadd.f32 %v303, %v1090
    %v1092 = vpop.f32.mrb[0].mxu0
    %1093 = vmatprep.mubr.bf16.mxu0 0
    %1094 = vmatmul.mubr.bf16.gmra.mrb[0].mxu0 %v725
    %v1095 = vpop.f32.mrb[0].mxu0
    %v1096 = vadd.f32 %v303, %v1095
    %v1097 = vpop.f32.mrb[0].mxu0
    %v1098 = vpop.f32.mrb[0].mxu0
    %v1099 = vadd.f32 %v303, %v1098
    %v1100 = vpop.f32.mrb[0].mxu0
    %1101 = vmatprep.mubr.bf16.mxu0 0
    %1102 = vmatmul.mubr.bf16.gmra.mrb[0].mxu0 %v728
    %v1103 = vpop.f32.mrb[0].mxu0
    %v1104 = vadd.f32 %v303, %v1103
    %v1105 = vpop.f32.mrb[0].mxu0
    %v1106 = vpop.f32.mrb[0].mxu0
    %v1107 = vadd.f32 %v303, %v1106
    %v1108 = vpop.f32.mrb[0].mxu0
    %1109 = vmatprep.mubr.bf16.mxu0 0
    %1110 = vmatmul.mubr.bf16.gmra.mrb[0].mxu0 %v731
    %v1111 = vpop.f32.mrb[0].mxu0
    %v1112 = vadd.f32 %v303, %v1111
    %v1113 = vpop.f32.mrb[0].mxu0
    %v1114 = vpop.f32.mrb[0].mxu0
    %v1115 = vadd.f32 %v303, %v1114
    %v1116 = vpop.f32.mrb[0].mxu0
    %1117 = vmatprep.mubr.bf16.mxu0 0
    %1118 = vmatmul.mubr.bf16.gmra.mrb[0].mxu0 %v734
    %v1119 = vpop.f32.mrb[0].mxu0
    %v1120 = vadd.f32 %v303, %v1119
    %v1121 = vpop.f32.mrb[0].mxu0
    %v1122 = vpop.f32.mrb[0].mxu0
    %v1123 = vadd.f32 %v303, %v1122
    %v1124 = vpop.f32.mrb[0].mxu0
    %1125 = vmatprep.mubr.bf16.mxu0 0
    %1126 = vmatmul.mubr.bf16.gmra.mrb[0].mxu0 %v737
    %v1127 = vpop.f32.mrb[0].mxu0
    %v1128 = vadd.f32 %v303, %v1127
    %v1129 = vpop.f32.mrb[0].mxu0
    %v1130 = vpop.f32.mrb[0].mxu0
    %v1131 = vadd.f32 %v303, %v1130
    %v1132 = vpop.f32.mrb[0].mxu0
    %1133 = vmatprep.mubr.bf16.mxu0 0
    %1134 = vmatmul.mubr.bf16.gmra.mrb[0].mxu0 %v740
    %v1135 = vpop.f32.mrb[0].mxu0
    %v1136 = vadd.f32 %v303, %v1135
    %v1137 = vpop.f32.mrb[0].mxu0
    %v1138 = vpop.f32.mrb[0].mxu0
    %v1139 = vadd.f32 %v303, %v1138
    %v1140 = vpop.f32.mrb[0].mxu0
    %1141 = vmatprep.mubr.bf16.mxu0 0
    %1142 = vmatmul.mubr.bf16.gmra.mrb[0].mxu0 %v743
    %v1143 = vpop.f32.mrb[0].mxu0
    %v1144 = vadd.f32 %v303, %v1143
    %v1145 = vpop.f32.mrb[0].mxu0
    %v1146 = vpop.f32.mrb[0].mxu0
    %v1147 = vadd.f32 %v303, %v1146
    %v1148 = vpop.f32.mrb[0].mxu0
    %1149 = vmatprep.mubr.bf16.mxu0 0
    %1150 = vmatmul.mubr.bf16.gmra.mrb[0].mxu0 %v746
    %v1151 = vpop.f32.mrb[0].mxu0
    %v1152 = vadd.f32 %v303, %v1151
    %v1153 = vpop.f32.mrb[0].mxu0
    %v1154 = vpop.f32.mrb[0].mxu0
    %v1155 = vadd.f32 %v303, %v1154
    %v1156 = vpop.f32.mrb[0].mxu0
    %1157 = vmatprep.mubr.bf16.mxu0 0
    %1158 = vmatmul.mubr.bf16.gmra.mrb[0].mxu0 %v749
    %v1159 = vpop.f32.mrb[0].mxu0
    %v1160 = vadd.f32 %v303, %v1159
    %v1161 = vpop.f32.mrb[0].mxu0
    %v1162 = vpop.f32.mrb[0].mxu0
    %v1163 = vadd.f32 %v303, %v1162
    %v1164 = vpop.f32.mrb[0].mxu0
    %1165 = vmatprep.mubr.bf16.mxu0 0
    %1166 = vmatmul.mubr.bf16.gmra.mrb[0].mxu0 %v752
    %v1167 = vpop.f32.mrb[0].mxu0
    %v1168 = vadd.f32 %v303, %v1167
    %v1169 = vpop.f32.mrb[0].mxu0
    %v1170 = vpop.f32.mrb[0].mxu0
    %v1171 = vadd.f32 %v303, %v1170
    %v1172 = vpop.f32.mrb[0].mxu0
    %1173 = vmatprep.mubr.bf16.mxu0 0
    %1174 = vmatmul.mubr.bf16.gmra.mrb[0].mxu0 %v755
    %v1175 = vpop.f32.mrb[0].mxu0
    %v1176 = vadd.f32 %v303, %v1175
    %v1177 = vpop.f32.mrb[0].mxu0
    %v1178 = vpop.f32.mrb[0].mxu0
    %v1179 = vadd.f32 %v303, %v1178
    %v1180 = vpop.f32.mrb[0].mxu0
    %1181 = vmatprep.mubr.bf16.mxu0 0
    %1182 = vmatmul.mubr.bf16.gmra.mrb[0].mxu0 %v758
    %v1183 = vpop.f32.mrb[0].mxu0
    %v1184 = vadd.f32 %v303, %v1183
    %v1185 = vpop.f32.mrb[0].mxu0
    %v1186 = vpop.f32.mrb[0].mxu0
    %v1187 = vadd.f32 %v303, %v1186
    %v1188 = vpop.f32.mrb[0].mxu0
    %1189 = vmatprep.mubr.bf16.mxu0 0
    %1190 = vmatmul.mubr.bf16.gmra.mrb[0].mxu0 %v761
    %v1191 = vpop.f32.mrb[0].mxu0
    %v1192 = vadd.f32 %v303, %v1191
    %v1193 = vpop.f32.mrb[0].mxu0
    %v1194 = vpop.f32.mrb[0].mxu0
    %v1195 = vadd.f32 %v303, %v1194
    %v1196 = vpop.f32.mrb[0].mxu0
    %1197 = vmatprep.mubr.bf16.mxu0 0
    %1198 = vmatmul.mubr.bf16.gmra.mrb[0].mxu0 %v764
    %v1199 = vpop.f32.mrb[0].mxu0
    %v1200 = vadd.f32 %v303, %v1199
    %v1201 = vpop.f32.mrb[0].mxu0
    %v1202 = vpop.f32.mrb[0].mxu0
    %v1203 = vadd.f32 %v303, %v1202
    %v1204 = vpop.f32.mrb[0].mxu0
    %1205 = vmatprep.mubr.bf16.mxu0 0
    %1206 = vmatmul.mubr.bf16.gmra.mrb[0].mxu0 %v767
    %v1207 = vpop.f32.mrb[0].mxu0
    %v1208 = vadd.f32 %v303, %v1207
    %v1209 = vpop.f32.mrb[0].mxu0
    %v1210 = vpop.f32.mrb[0].mxu0
    %v1211 = vadd.f32 %v303, %v1210
    %v1212 = vpop.f32.mrb[0].mxu0
    %1213 = vmatprep.mubr.bf16.mxu0 0
    %1214 = vmatmul.mubr.bf16.gmra.mrb[0].mxu0 %v770
    %v1215 = vpop.f32.mrb[0].mxu0
    %v1216 = vadd.f32 %v303, %v1215
    %v1217 = vpop.f32.mrb[0].mxu0
    %v1218 = vpop.f32.mrb[0].mxu0
    %v1219 = vadd.f32 %v303, %v1218
    %v1220 = vpop.f32.mrb[0].mxu0
    %1221 = vmatprep.mubr.bf16.mxu0 0
    %1222 = vmatmul.mubr.bf16.gmra.mrb[0].mxu0 %v773
    %v1223 = vpop.f32.mrb[0].mxu0
    %v1224 = vadd.f32 %v303, %v1223
    %v1225 = vpop.f32.mrb[0].mxu0
    %v1226 = vpop.f32.mrb[0].mxu0
    %v1227 = vadd.f32 %v303, %v1226
    %v1228 = vpop.f32.mrb[0].mxu0
    %1229 = vmatprep.mubr.bf16.mxu0 0
    %1230 = vmatmul.mubr.bf16.gmra.mrb[0].mxu0 %v776
    %v1231 = vpop.f32.mrb[0].mxu0
    %v1232 = vadd.f32 %v303, %v1231
    %v1233 = vpop.f32.mrb[0].mxu0
    %v1234 = vpop.f32.mrb[0].mxu0
    %v1235 = vadd.f32 %v303, %v1234
    %v1236 = vpop.f32.mrb[0].mxu0
    %1237 = vmatprep.mubr.bf16.mxu0 0
    %1238 = vmatmul.mubr.bf16.gmra.mrb[0].mxu0 %v779
    %v1239 = vpop.f32.mrb[0].mxu0
    %v1240 = vadd.f32 %v303, %v1239
    %v1241 = vpop.f32.mrb[0].mxu0
    %v1242 = vpop.f32.mrb[0].mxu0
    %v1243 = vadd.f32 %v303, %v1242
    %v1244 = vpop.f32.mrb[0].mxu0
    %1245 = vmatprep.mubr.bf16.mxu0 0
    %1246 = vmatmul.mubr.bf16.gmra.mrb[0].mxu0 %v782
    %v1247 = vpop.f32.mrb[0].mxu0
    %v1248 = vadd.f32 %v303, %v1247
    %v1249 = vpop.f32.mrb[0].mxu0
    %v1250 = vpop.f32.mrb[0].mxu0
    %v1251 = vadd.f32 %v303, %v1250
    %v1252 = vpop.f32.mrb[0].mxu0
    %1253 = vmatprep.mubr.bf16.mxu0 0
    %1254 = vmatmul.mubr.bf16.gmra.mrb[0].mxu0 %v785
    %v1255 = vpop.f32.mrb[0].mxu0
    %v1256 = vadd.f32 %v303, %v1255
    %v1257 = vpop.f32.mrb[0].mxu0
    %v1258 = vpop.f32.mrb[0].mxu0
    %v1259 = vadd.f32 %v303, %v1258
    %v1260 = vpop.f32.mrb[0].mxu0
    %1261 = vmatprep.mubr.bf16.mxu0 0
    %1262 = vmatmul.mubr.bf16.gmra.mrb[0].mxu0 %v788
    %v1263 = vpop.f32.mrb[0].mxu0
    %v1264 = vadd.f32 %v303, %v1263
    %v1265 = vpop.f32.mrb[0].mxu0
    %v1266 = vpop.f32.mrb[0].mxu0
    %v1267 = vadd.f32 %v303, %v1266
    %v1268 = vpop.f32.mrb[0].mxu0
    %1269 = vmatprep.mubr.bf16.mxu0 0
    %1270 = vmatmul.mubr.bf16.gmra.mrb[0].mxu0 %v791
    %v1271 = vpop.f32.mrb[0].mxu0
    %v1272 = vadd.f32 %v303, %v1271
    %v1273 = vpop.f32.mrb[0].mxu0
    %v1274 = vpop.f32.mrb[0].mxu0
    %v1275 = vadd.f32 %v303, %v1274
    %v1276 = vpop.f32.mrb[0].mxu0
    %1277 = vmatprep.mubr.bf16.mxu0 0
    %1278 = vmatmul.mubr.bf16.gmra.mrb[0].mxu0 %v794
    %v1279 = vpop.f32.mrb[0].mxu0
    %v1280 = vadd.f32 %v303, %v1279
    %v1281 = vpop.f32.mrb[0].mxu0
    %v1282 = vpop.f32.mrb[0].mxu0
    %v1283 = vadd.f32 %v303, %v1282
    %v1284 = vpop.f32.mrb[0].mxu0
    %1285 = vmatprep.mubr.bf16.mxu0 0
    %1286 = vmatmul.mubr.bf16.gmra.mrb[0].mxu0 %v797
    %v1287 = vpop.f32.mrb[0].mxu0
    %v1288 = vadd.f32 %v303, %v1287
    %v1289 = vpop.f32.mrb[0].mxu0
    %v1290 = vpop.f32.mrb[0].mxu0
    %v1291 = vadd.f32 %v303, %v1290
    %v1292 = vpop.f32.mrb[0].mxu0
    %1293 = vmatprep.mubr.bf16.mxu0 0
    %1294 = vmatmul.mubr.bf16.gmra.mrb[0].mxu0 %v800
    %v1295 = vpop.f32.mrb[0].mxu0
    %v1296 = vadd.f32 %v303, %v1295
    %v1297 = vpop.f32.mrb[0].mxu0
    %v1298 = vpop.f32.mrb[0].mxu0
    %v1299 = vadd.f32 %v303, %v1298
    %v1300 = vpop.f32.mrb[0].mxu0
    %1301 = vmatprep.mubr.bf16.mxu0 0
    %1302 = vmatmul.mubr.bf16.gmra.mrb[0].mxu0 %v803
    %v1303 = vpop.f32.mrb[0].mxu0
    %v1304 = vadd.f32 %v303, %v1303
    %v1305 = vpop.f32.mrb[0].mxu0
    %v1306 = vpop.f32.mrb[0].mxu0
    %v1307 = vadd.f32 %v303, %v1306
    %v1308 = vpop.f32.mrb[0].mxu0
    %1309 = vmatprep.mubr.bf16.mxu0 0
    %1310 = vmatmul.mubr.bf16.gmra.mrb[0].mxu0 %v806
    %v1311 = vpop.f32.mrb[0].mxu0
    %v1312 = vadd.f32 %v303, %v1311
    %v1313 = vpop.f32.mrb[0].mxu0
    %v1314 = vpop.f32.mrb[0].mxu0
    %v1315 = vadd.f32 %v303, %v1314
    %v1316 = vpop.f32.mrb[0].mxu0
    %1317 = vmatprep.mubr.bf16.mxu0 0
    %1318 = vmatmul.mubr.bf16.gmra.mrb[0].mxu0 %v809
    %v1319 = vpop.f32.mrb[0].mxu0
    %v1320 = vadd.f32 %v303, %v1319
    %v1321 = vpop.f32.mrb[0].mxu0
    %v1322 = vpop.f32.mrb[0].mxu0
    %v1323 = vadd.f32 %v303, %v1322
    %v1324 = vpop.f32.mrb[0].mxu0
    %1325 = vmatprep.mubr.bf16.mxu0 0
    %1326 = vmatmul.mubr.bf16.gmra.mrb[0].mxu0 %v812
    %v1327 = vpop.f32.mrb[0].mxu0
    %v1328 = vadd.f32 %v303, %v1327
    %v1329 = vpop.f32.mrb[0].mxu0
    %v1330 = vpop.f32.mrb[0].mxu0
    %v1331 = vadd.f32 %v303, %v1330
    %v1332 = vpop.f32.mrb[0].mxu0
    %1333 = vmatprep.mubr.bf16.mxu0 0
    %1334 = vmatmul.mubr.bf16.gmra.mrb[0].mxu0 %v815
    %v1335 = vpop.f32.mrb[0].mxu0
    %v1336 = vadd.f32 %v303, %v1335
    %v1337 = vpop.f32.mrb[0].mxu0
    %v1338 = vpop.f32.mrb[0].mxu0
    %v1339 = vadd.f32 %v303, %v1338
    %v1340 = vpop.f32.mrb[0].mxu0
    %1341 = vmatprep.mubr.bf16.mxu0 0
    %1342 = vmatmul.mubr.bf16.gmra.mrb[0].mxu0 %v818
    %v1343 = vpop.f32.mrb[0].mxu0
    %v1344 = vadd.f32 %v303, %v1343
    %v1345 = vpop.f32.mrb[0].mxu0
    %v1346 = vpop.f32.mrb[0].mxu0
    %v1347 = vadd.f32 %v303, %v1346
    %v1348 = vpop.f32.mrb[0].mxu0
    %1349 = vmatprep.mubr.bf16.mxu0 0
    %1350 = vmatmul.mubr.bf16.gmra.mrb[0].mxu0 %v821
    %v1351 = vpop.f32.mrb[0].mxu0
    %v1352 = vadd.f32 %v303, %v1351
    %v1353 = vpop.f32.mrb[0].mxu0
    %v1354 = vpop.f32.mrb[0].mxu0
    %v1355 = vadd.f32 %v303, %v1354
    %v1356 = vpop.f32.mrb[0].mxu0
    %1357 = vmatprep.mubr.bf16.mxu0 0
    %1358 = vmatmul.mubr.bf16.gmra.mrb[0].mxu0 %v824
    %v1359 = vpop.f32.mrb[0].mxu0
    %v1360 = vadd.f32 %v303, %v1359
    %v1361 = vpop.f32.mrb[0].mxu0
    %v1362 = vpop.f32.mrb[0].mxu0
    %v1363 = vadd.f32 %v303, %v1362
    %v1364 = vpop.f32.mrb[0].mxu0
    %1365 = vmatprep.mubr.bf16.mxu0 0
    %1366 = vmatmul.mubr.bf16.gmra.mrb[0].mxu0 %v827
    %v1367 = vpop.f32.mrb[0].mxu0
    %v1368 = vadd.f32 %v303, %v1367
    %v1369 = vpop.f32.mrb[0].mxu0
    %v1370 = vpop.f32.mrb[0].mxu0
    %v1371 = vadd.f32 %v303, %v1370
    %v1372 = vpop.f32.mrb[0].mxu0
    %1373 = vdwg.mxu0
    %vm1374 = vcmask 130048
    %v1376 = vsel %vm1374, %v136, 0
    %v1379 = vsel %vm1374, %v864, 0
    %v1382 = vsel %vm1374, %v867, 0
    %v1385 = vsel %vm1374, %v872, 0
    %v1388 = vsel %vm1374, %v875, 0
    %v1391 = vsel %vm1374, %v880, 0
    %v1394 = vsel %vm1374, %v883, 0
    %v1397 = vsel %vm1374, %v888, 0
    %v1400 = vsel %vm1374, %v891, 0
    %v1403 = vsel %vm1374, %v896, 0
    %v1406 = vsel %vm1374, %v899, 0
    %v1409 = vsel %vm1374, %v904, 0
    %v1412 = vsel %vm1374, %v907, 0
    %v1415 = vsel %vm1374, %v912, 0
    %v1418 = vsel %vm1374, %v915, 0
    %v1421 = vsel %vm1374, %v920, 0
    %v1424 = vsel %vm1374, %v923, 0
    %1426 = vmatprep.subr.mxu0 0.0
    %1427 = vmatpush1.xpose.msra.mxu0 %v1379
    %1428 = vmatprep.subr.mxu0 0.0
    %1429 = vmatpush1.xpose.msra.mxu0 %v1382
    %1430 = vmatprep.subr.mxu0 0.0
    %1431 = vmatpush1.xpose.msra.mxu0 %v1385
    %1432 = vmatprep.subr.mxu0 0.0
    %1433 = vmatpush1.xpose.msra.mxu0 %v1388
    %1434 = vmatprep.subr.mxu0 0.0
    %1435 = vmatpush1.xpose.msra.mxu0 %v1391
    %1436 = vmatprep.subr.mxu0 0.0
    %1437 = vmatpush1.xpose.msra.mxu0 %v1394
    %1438 = vmatprep.subr.mxu0 0.0
    %1439 = vmatpush1.xpose.msra.mxu0 %v1397
    %1440 = vmatprep.subr.mxu0 0.0
    %1441 = vmatpush1.xpose.msra.mxu0 %v1400
    %1442 = vmatprep.subr.mxu0 0.0
    %1443 = vmatpush1.xpose.msra.mxu0 %v1403
    %1444 = vmatprep.subr.mxu0 0.0
    %1445 = vmatpush1.xpose.msra.mxu0 %v1406
    %1446 = vmatprep.subr.mxu0 0.0
    %1447 = vmatpush1.xpose.msra.mxu0 %v1409
    %1448 = vmatprep.subr.mxu0 0.0
    %1449 = vmatpush1.xpose.msra.mxu0 %v1412
    %1450 = vmatprep.subr.mxu0 0.0
    %1451 = vmatpush1.xpose.msra.mxu0 %v1415
    %1452 = vmatprep.subr.mxu0 0.0
    %1453 = vmatpush1.xpose.msra.mxu0 %v1418
    %1454 = vmatprep.subr.mxu0 0.0
    %1455 = vmatpush1.xpose.msra.mxu0 %v1421
    %1456 = vmatprep.subr.mxu0 0.0
    %1457 = vmatpush1.xpose.msra.mxu0 %v1424
    %1458 = vmatprep.subr.mxu0 0.0
    %1459 = vmatpush1.xpose.msra.mxu0 0.0
    %1460 = vmatprep.subr.mxu0 0.0
    %1461 = vmatpush1.xpose.msra.mxu0 0.0
    %1462 = vmatprep.subr.mxu0 0.0
    %1463 = vmatpush1.xpose.msra.mxu0 0.0
    %1464 = vmatprep.subr.mxu0 0.0
    %1465 = vmatpush1.xpose.msra.mxu0 0.0
    %1466 = vmatprep.subr.mxu0 0.0
    %1467 = vmatpush1.xpose.msra.mxu0 0.0
    %1468 = vmatprep.subr.mxu0 0.0
    %1469 = vmatpush1.xpose.msra.mxu0 0.0
    %1470 = vmatprep.subr.mxu0 0.0
    %1471 = vmatpush1.xpose.msra.mxu0 0.0
    %1472 = vmatprep.subr.mxu0 0.0
    %1473 = vmatpush1.xpose.msra.mxu0 0.0
    %1474 = vmatprep.subr.mxu0 0.0
    %1475 = vmatpush1.xpose.msra.mxu0 0.0
    %1476 = vmatprep.subr.mxu0 0.0
    %1477 = vmatpush1.xpose.msra.mxu0 0.0
    %1478 = vmatprep.subr.mxu0 0.0
    %1479 = vmatpush1.xpose.msra.mxu0 0.0
    %1480 = vmatprep.subr.mxu0 0.0
    %1481 = vmatpush1.xpose.msra.mxu0 0.0
    %1482 = vmatprep.subr.mxu0 0.0
    %1483 = vmatpush1.xpose.msra.mxu0 0.0
    %1484 = vmatprep.subr.mxu0 0.0
    %1485 = vmatpush1.xpose.msra.mxu0 0.0
    %1486 = vmatprep.subr.mxu0 0.0
    %1487 = vmatpush1.xpose.msra.mxu0 0.0
    %1488 = vmatprep.subr.mxu0 0.0
    %1489 = vmatpush1.xpose.msra.mxu0 0.0
    %1490 = vmatprep.mubr.f32.mxu0 0.0
    %1491 = vmatmul.mubr.f32.gmra.mrb[0].mxu0 %v1376
    %v1492 = vpop.f32.mrb[0].mxu0
    %v1493 = vadd.f32 0.0, %v1492
    %v1494 = vpop.f32.mrb[0].mxu0
    %1495 = vdwg.mxu0
    %v1497 = vsel %vm1374, %v139, 0
    %v1500 = vsel %vm1374, %v928, 0
    %v1503 = vsel %vm1374, %v931, 0
    %v1506 = vsel %vm1374, %v936, 0
    %v1509 = vsel %vm1374, %v939, 0
    %v1512 = vsel %vm1374, %v944, 0
    %v1515 = vsel %vm1374, %v947, 0
    %v1518 = vsel %vm1374, %v952, 0
    %v1521 = vsel %vm1374, %v955, 0
    %v1524 = vsel %vm1374, %v960, 0
    %v1527 = vsel %vm1374, %v963, 0
    %v1530 = vsel %vm1374, %v968, 0
    %v1533 = vsel %vm1374, %v971, 0
    %v1536 = vsel %vm1374, %v976, 0
    %v1539 = vsel %vm1374, %v979, 0
    %v1542 = vsel %vm1374, %v984, 0
    %v1545 = vsel %vm1374, %v987, 0
    %1547 = vmatprep.subr.mxu0 0.0
    %1548 = vmatpush1.xpose.msra.mxu0 %v1500
    %1549 = vmatprep.subr.mxu0 0.0
    %1550 = vmatpush1.xpose.msra.mxu0 %v1503
    %1551 = vmatprep.subr.mxu0 0.0
    %1552 = vmatpush1.xpose.msra.mxu0 %v1506
    %1553 = vmatprep.subr.mxu0 0.0
    %1554 = vmatpush1.xpose.msra.mxu0 %v1509
    %1555 = vmatprep.subr.mxu0 0.0
    %1556 = vmatpush1.xpose.msra.mxu0 %v1512
    %1557 = vmatprep.subr.mxu0 0.0
    %1558 = vmatpush1.xpose.msra.mxu0 %v1515
    %1559 = vmatprep.subr.mxu0 0.0
    %1560 = vmatpush1.xpose.msra.mxu0 %v1518
    %1561 = vmatprep.subr.mxu0 0.0
    %1562 = vmatpush1.xpose.msra.mxu0 %v1521
    %1563 = vmatprep.subr.mxu0 0.0
    %1564 = vmatpush1.xpose.msra.mxu0 %v1524
    %1565 = vmatprep.subr.mxu0 0.0
    %1566 = vmatpush1.xpose.msra.mxu0 %v1527
    %1567 = vmatprep.subr.mxu0 0.0
    %1568 = vmatpush1.xpose.msra.mxu0 %v1530
    %1569 = vmatprep.subr.mxu0 0.0
    %1570 = vmatpush1.xpose.msra.mxu0 %v1533
    %1571 = vmatprep.subr.mxu0 0.0
    %1572 = vmatpush1.xpose.msra.mxu0 %v1536
    %1573 = vmatprep.subr.mxu0 0.0
    %1574 = vmatpush1.xpose.msra.mxu0 %v1539
    %1575 = vmatprep.subr.mxu0 0.0
    %1576 = vmatpush1.xpose.msra.mxu0 %v1542
    %1577 = vmatprep.subr.mxu0 0.0
    %1578 = vmatpush1.xpose.msra.mxu0 %v1545
    %1579 = vmatprep.subr.mxu0 0.0
    %1580 = vmatpush1.xpose.msra.mxu0 0.0
    %1581 = vmatprep.subr.mxu0 0.0
    %1582 = vmatpush1.xpose.msra.mxu0 0.0
    %1583 = vmatprep.subr.mxu0 0.0
    %1584 = vmatpush1.xpose.msra.mxu0 0.0
    %1585 = vmatprep.subr.mxu0 0.0
    %1586 = vmatpush1.xpose.msra.mxu0 0.0
    %1587 = vmatprep.subr.mxu0 0.0
    %1588 = vmatpush1.xpose.msra.mxu0 0.0
    %1589 = vmatprep.subr.mxu0 0.0
    %1590 = vmatpush1.xpose.msra.mxu0 0.0
    %1591 = vmatprep.subr.mxu0 0.0
    %1592 = vmatpush1.xpose.msra.mxu0 0.0
    %1593 = vmatprep.subr.mxu0 0.0
    %1594 = vmatpush1.xpose.msra.mxu0 0.0
    %1595 = vmatprep.subr.mxu0 0.0
    %1596 = vmatpush1.xpose.msra.mxu0 0.0
    %1597 = vmatprep.subr.mxu0 0.0
    %1598 = vmatpush1.xpose.msra.mxu0 0.0
    %1599 = vmatprep.subr.mxu0 0.0
    %1600 = vmatpush1.xpose.msra.mxu0 0.0
    %1601 = vmatprep.subr.mxu0 0.0
    %1602 = vmatpush1.xpose.msra.mxu0 0.0
    %1603 = vmatprep.subr.mxu0 0.0
    %1604 = vmatpush1.xpose.msra.mxu0 0.0
    %1605 = vmatprep.subr.mxu0 0.0
    %1606 = vmatpush1.xpose.msra.mxu0 0.0
    %1607 = vmatprep.subr.mxu0 0.0
    %1608 = vmatpush1.xpose.msra.mxu0 0.0
    %1609 = vmatprep.subr.mxu0 0.0
    %1610 = vmatpush1.xpose.msra.mxu0 0.0
    %1611 = vmatprep.mubr.f32.mxu0 0.0
    %1612 = vmatmul.mubr.f32.gmra.mrb[0].mxu0 %v1497
    %v1613 = vpop.f32.mrb[0].mxu0
    %v1614 = vadd.f32 0.0, %v1613
    %v1615 = vpop.f32.mrb[0].mxu0
    %1616 = vdwg.mxu0
    %v1618 = vsel %vm1374, %v144, 0
    %v1621 = vsel %vm1374, %v992, 0
    %v1624 = vsel %vm1374, %v995, 0
    %v1627 = vsel %vm1374, %v1000, 0
    %v1630 = vsel %vm1374, %v1003, 0
    %v1633 = vsel %vm1374, %v1008, 0
    %v1636 = vsel %vm1374, %v1011, 0
    %v1639 = vsel %vm1374, %v1016, 0
    %v1642 = vsel %vm1374, %v1019, 0
    %v1645 = vsel %vm1374, %v1024, 0
    %v1648 = vsel %vm1374, %v1027, 0
    %v1651 = vsel %vm1374, %v1032, 0
    %v1654 = vsel %vm1374, %v1035, 0
    %v1657 = vsel %vm1374, %v1040, 0
    %v1660 = vsel %vm1374, %v1043, 0
    %v1663 = vsel %vm1374, %v1048, 0
    %v1666 = vsel %vm1374, %v1051, 0
    %1668 = vmatprep.subr.mxu0 0.0
    %1669 = vmatpush1.xpose.msra.mxu0 %v1621
    %1670 = vmatprep.subr.mxu0 0.0
    %1671 = vmatpush1.xpose.msra.mxu0 %v1624
    %1672 = vmatprep.subr.mxu0 0.0
    %1673 = vmatpush1.xpose.msra.mxu0 %v1627
    %1674 = vmatprep.subr.mxu0 0.0
    %1675 = vmatpush1.xpose.msra.mxu0 %v1630
    %1676 = vmatprep.subr.mxu0 0.0
    %1677 = vmatpush1.xpose.msra.mxu0 %v1633
    %1678 = vmatprep.subr.mxu0 0.0
    %1679 = vmatpush1.xpose.msra.mxu0 %v1636
    %1680 = vmatprep.subr.mxu0 0.0
    %1681 = vmatpush1.xpose.msra.mxu0 %v1639
    %1682 = vmatprep.subr.mxu0 0.0
    %1683 = vmatpush1.xpose.msra.mxu0 %v1642
    %1684 = vmatprep.subr.mxu0 0.0
    %1685 = vmatpush1.xpose.msra.mxu0 %v1645
    %1686 = vmatprep.subr.mxu0 0.0
    %1687 = vmatpush1.xpose.msra.mxu0 %v1648
    %1688 = vmatprep.subr.mxu0 0.0
    %1689 = vmatpush1.xpose.msra.mxu0 %v1651
    %1690 = vmatprep.subr.mxu0 0.0
    %1691 = vmatpush1.xpose.msra.mxu0 %v1654
    %1692 = vmatprep.subr.mxu0 0.0
    %1693 = vmatpush1.xpose.msra.mxu0 %v1657
    %1694 = vmatprep.subr.mxu0 0.0
    %1695 = vmatpush1.xpose.msra.mxu0 %v1660
    %1696 = vmatprep.subr.mxu0 0.0
    %1697 = vmatpush1.xpose.msra.mxu0 %v1663
    %1698 = vmatprep.subr.mxu0 0.0
    %1699 = vmatpush1.xpose.msra.mxu0 %v1666
    %1700 = vmatprep.subr.mxu0 0.0
    %1701 = vmatpush1.xpose.msra.mxu0 0.0
    %1702 = vmatprep.subr.mxu0 0.0
    %1703 = vmatpush1.xpose.msra.mxu0 0.0
    %1704 = vmatprep.subr.mxu0 0.0
    %1705 = vmatpush1.xpose.msra.mxu0 0.0
    %1706 = vmatprep.subr.mxu0 0.0
    %1707 = vmatpush1.xpose.msra.mxu0 0.0
    %1708 = vmatprep.subr.mxu0 0.0
    %1709 = vmatpush1.xpose.msra.mxu0 0.0
    %1710 = vmatprep.subr.mxu0 0.0
    %1711 = vmatpush1.xpose.msra.mxu0 0.0
    %1712 = vmatprep.subr.mxu0 0.0
    %1713 = vmatpush1.xpose.msra.mxu0 0.0
    %1714 = vmatprep.subr.mxu0 0.0
    %1715 = vmatpush1.xpose.msra.mxu0 0.0
    %1716 = vmatprep.subr.mxu0 0.0
    %1717 = vmatpush1.xpose.msra.mxu0 0.0
    %1718 = vmatprep.subr.mxu0 0.0
    %1719 = vmatpush1.xpose.msra.mxu0 0.0
    %1720 = vmatprep.subr.mxu0 0.0
    %1721 = vmatpush1.xpose.msra.mxu0 0.0
    %1722 = vmatprep.subr.mxu0 0.0
    %1723 = vmatpush1.xpose.msra.mxu0 0.0
    %1724 = vmatprep.subr.mxu0 0.0
    %1725 = vmatpush1.xpose.msra.mxu0 0.0
    %1726 = vmatprep.subr.mxu0 0.0
    %1727 = vmatpush1.xpose.msra.mxu0 0.0
    %1728 = vmatprep.subr.mxu0 0.0
    %1729 = vmatpush1.xpose.msra.mxu0 0.0
    %1730 = vmatprep.subr.mxu0 0.0
    %1731 = vmatpush1.xpose.msra.mxu0 0.0
    %1732 = vmatprep.mubr.f32.mxu0 0.0
    %1733 = vmatmul.mubr.f32.gmra.mrb[0].mxu0 %v1618
    %v1734 = vpop.f32.mrb[0].mxu0
    %v1735 = vadd.f32 0.0, %v1734
    %v1736 = vpop.f32.mrb[0].mxu0
    %1737 = vdwg.mxu0
    %v1739 = vsel %vm1374, %v147, 0
    %v1742 = vsel %vm1374, %v1056, 0
    %v1745 = vsel %vm1374, %v1059, 0
    %v1748 = vsel %vm1374, %v1064, 0
    %v1751 = vsel %vm1374, %v1067, 0
    %v1754 = vsel %vm1374, %v1072, 0
    %v1757 = vsel %vm1374, %v1075, 0
    %v1760 = vsel %vm1374, %v1080, 0
    %v1763 = vsel %vm1374, %v1083, 0
    %v1766 = vsel %vm1374, %v1088, 0
    %v1769 = vsel %vm1374, %v1091, 0
    %v1772 = vsel %vm1374, %v1096, 0
    %v1775 = vsel %vm1374, %v1099, 0
    %v1778 = vsel %vm1374, %v1104, 0
    %v1781 = vsel %vm1374, %v1107, 0
    %v1784 = vsel %vm1374, %v1112, 0
    %v1787 = vsel %vm1374, %v1115, 0
    %1789 = vmatprep.subr.mxu0 0.0
    %1790 = vmatpush1.xpose.msra.mxu0 %v1742
    %1791 = vmatprep.subr.mxu0 0.0
    %1792 = vmatpush1.xpose.msra.mxu0 %v1745
    %1793 = vmatprep.subr.mxu0 0.0
    %1794 = vmatpush1.xpose.msra.mxu0 %v1748
    %1795 = vmatprep.subr.mxu0 0.0
    %1796 = vmatpush1.xpose.msra.mxu0 %v1751
    %1797 = vmatprep.subr.mxu0 0.0
    %1798 = vmatpush1.xpose.msra.mxu0 %v1754
    %1799 = vmatprep.subr.mxu0 0.0
    %1800 = vmatpush1.xpose.msra.mxu0 %v1757
    %1801 = vmatprep.subr.mxu0 0.0
    %1802 = vmatpush1.xpose.msra.mxu0 %v1760
    %1803 = vmatprep.subr.mxu0 0.0
    %1804 = vmatpush1.xpose.msra.mxu0 %v1763
    %1805 = vmatprep.subr.mxu0 0.0
    %1806 = vmatpush1.xpose.msra.mxu0 %v1766
    %1807 = vmatprep.subr.mxu0 0.0
    %1808 = vmatpush1.xpose.msra.mxu0 %v1769
    %1809 = vmatprep.subr.mxu0 0.0
    %1810 = vmatpush1.xpose.msra.mxu0 %v1772
    %1811 = vmatprep.subr.mxu0 0.0
    %1812 = vmatpush1.xpose.msra.mxu0 %v1775
    %1813 = vmatprep.subr.mxu0 0.0
    %1814 = vmatpush1.xpose.msra.mxu0 %v1778
    %1815 = vmatprep.subr.mxu0 0.0
    %1816 = vmatpush1.xpose.msra.mxu0 %v1781
    %1817 = vmatprep.subr.mxu0 0.0
    %1818 = vmatpush1.xpose.msra.mxu0 %v1784
    %1819 = vmatprep.subr.mxu0 0.0
    %1820 = vmatpush1.xpose.msra.mxu0 %v1787
    %1821 = vmatprep.subr.mxu0 0.0
    %1822 = vmatpush1.xpose.msra.mxu0 0.0
    %1823 = vmatprep.subr.mxu0 0.0
    %1824 = vmatpush1.xpose.msra.mxu0 0.0
    %1825 = vmatprep.subr.mxu0 0.0
    %1826 = vmatpush1.xpose.msra.mxu0 0.0
    %1827 = vmatprep.subr.mxu0 0.0
    %1828 = vmatpush1.xpose.msra.mxu0 0.0
    %1829 = vmatprep.subr.mxu0 0.0
    %1830 = vmatpush1.xpose.msra.mxu0 0.0
    %1831 = vmatprep.subr.mxu0 0.0
    %1832 = vmatpush1.xpose.msra.mxu0 0.0
    %1833 = vmatprep.subr.mxu0 0.0
    %1834 = vmatpush1.xpose.msra.mxu0 0.0
    %1835 = vmatprep.subr.mxu0 0.0
    %1836 = vmatpush1.xpose.msra.mxu0 0.0
    %1837 = vmatprep.subr.mxu0 0.0
    %1838 = vmatpush1.xpose.msra.mxu0 0.0
    %1839 = vmatprep.subr.mxu0 0.0
    %1840 = vmatpush1.xpose.msra.mxu0 0.0
    %1841 = vmatprep.subr.mxu0 0.0
    %1842 = vmatpush1.xpose.msra.mxu0 0.0
    %1843 = vmatprep.subr.mxu0 0.0
    %1844 = vmatpush1.xpose.msra.mxu0 0.0
    %1845 = vmatprep.subr.mxu0 0.0
    %1846 = vmatpush1.xpose.msra.mxu0 0.0
    %1847 = vmatprep.subr.mxu0 0.0
    %1848 = vmatpush1.xpose.msra.mxu0 0.0
    %1849 = vmatprep.subr.mxu0 0.0
    %1850 = vmatpush1.xpose.msra.mxu0 0.0
    %1851 = vmatprep.subr.mxu0 0.0
    %1852 = vmatpush1.xpose.msra.mxu0 0.0
    %1853 = vmatprep.mubr.f32.mxu0 0.0
    %1854 = vmatmul.mubr.f32.gmra.mrb[0].mxu0 %v1739
    %v1855 = vpop.f32.mrb[0].mxu0
    %v1856 = vadd.f32 0.0, %v1855
    %v1857 = vpop.f32.mrb[0].mxu0
    %1858 = vdwg.mxu0
    %v1860 = vsel %vm1374, %v152, 0
    %v1863 = vsel %vm1374, %v1120, 0
    %v1866 = vsel %vm1374, %v1123, 0
    %v1869 = vsel %vm1374, %v1128, 0
    %v1872 = vsel %vm1374, %v1131, 0
    %v1875 = vsel %vm1374, %v1136, 0
    %v1878 = vsel %vm1374, %v1139, 0
    %v1881 = vsel %vm1374, %v1144, 0
    %v1884 = vsel %vm1374, %v1147, 0
    %v1887 = vsel %vm1374, %v1152, 0
    %v1890 = vsel %vm1374, %v1155, 0
    %v1893 = vsel %vm1374, %v1160, 0
    %v1896 = vsel %vm1374, %v1163, 0
    %v1899 = vsel %vm1374, %v1168, 0
    %v1902 = vsel %vm1374, %v1171, 0
    %v1905 = vsel %vm1374, %v1176, 0
    %v1908 = vsel %vm1374, %v1179, 0
    %1910 = vmatprep.subr.mxu0 0.0
    %1911 = vmatpush1.xpose.msra.mxu0 %v1863
    %1912 = vmatprep.subr.mxu0 0.0
    %1913 = vmatpush1.xpose.msra.mxu0 %v1866
    %1914 = vmatprep.subr.mxu0 0.0
    %1915 = vmatpush1.xpose.msra.mxu0 %v1869
    %1916 = vmatprep.subr.mxu0 0.0
    %1917 = vmatpush1.xpose.msra.mxu0 %v1872
    %1918 = vmatprep.subr.mxu0 0.0
    %1919 = vmatpush1.xpose.msra.mxu0 %v1875
    %1920 = vmatprep.subr.mxu0 0.0
    %1921 = vmatpush1.xpose.msra.mxu0 %v1878
    %1922 = vmatprep.subr.mxu0 0.0
    %1923 = vmatpush1.xpose.msra.mxu0 %v1881
    %1924 = vmatprep.subr.mxu0 0.0
    %1925 = vmatpush1.xpose.msra.mxu0 %v1884
    %1926 = vmatprep.subr.mxu0 0.0
    %1927 = vmatpush1.xpose.msra.mxu0 %v1887
    %1928 = vmatprep.subr.mxu0 0.0
    %1929 = vmatpush1.xpose.msra.mxu0 %v1890
    %1930 = vmatprep.subr.mxu0 0.0
    %1931 = vmatpush1.xpose.msra.mxu0 %v1893
    %1932 = vmatprep.subr.mxu0 0.0
    %1933 = vmatpush1.xpose.msra.mxu0 %v1896
    %1934 = vmatprep.subr.mxu0 0.0
    %1935 = vmatpush1.xpose.msra.mxu0 %v1899
    %1936 = vmatprep.subr.mxu0 0.0
    %1937 = vmatpush1.xpose.msra.mxu0 %v1902
    %1938 = vmatprep.subr.mxu0 0.0
    %1939 = vmatpush1.xpose.msra.mxu0 %v1905
    %1940 = vmatprep.subr.mxu0 0.0
    %1941 = vmatpush1.xpose.msra.mxu0 %v1908
    %1942 = vmatprep.subr.mxu0 0.0
    %1943 = vmatpush1.xpose.msra.mxu0 0.0
    %1944 = vmatprep.subr.mxu0 0.0
    %1945 = vmatpush1.xpose.msra.mxu0 0.0
    %1946 = vmatprep.subr.mxu0 0.0
    %1947 = vmatpush1.xpose.msra.mxu0 0.0
    %1948 = vmatprep.subr.mxu0 0.0
    %1949 = vmatpush1.xpose.msra.mxu0 0.0
    %1950 = vmatprep.subr.mxu0 0.0
    %1951 = vmatpush1.xpose.msra.mxu0 0.0
    %1952 = vmatprep.subr.mxu0 0.0
    %1953 = vmatpush1.xpose.msra.mxu0 0.0
    %1954 = vmatprep.subr.mxu0 0.0
    %1955 = vmatpush1.xpose.msra.mxu0 0.0
    %1956 = vmatprep.subr.mxu0 0.0
    %1957 = vmatpush1.xpose.msra.mxu0 0.0
    %1958 = vmatprep.subr.mxu0 0.0
    %1959 = vmatpush1.xpose.msra.mxu0 0.0
    %1960 = vmatprep.subr.mxu0 0.0
    %1961 = vmatpush1.xpose.msra.mxu0 0.0
    %1962 = vmatprep.subr.mxu0 0.0
    %1963 = vmatpush1.xpose.msra.mxu0 0.0
    %1964 = vmatprep.subr.mxu0 0.0
    %1965 = vmatpush1.xpose.msra.mxu0 0.0
    %1966 = vmatprep.subr.mxu0 0.0
    %1967 = vmatpush1.xpose.msra.mxu0 0.0
    %1968 = vmatprep.subr.mxu0 0.0
    %1969 = vmatpush1.xpose.msra.mxu0 0.0
    %1970 = vmatprep.subr.mxu0 0.0
    %1971 = vmatpush1.xpose.msra.mxu0 0.0
    %1972 = vmatprep.subr.mxu0 0.0
    %1973 = vmatpush1.xpose.msra.mxu0 0.0
    %1974 = vmatprep.mubr.f32.mxu0 0.0
    %1975 = vmatmul.mubr.f32.gmra.mrb[0].mxu0 %v1860
    %v1976 = vpop.f32.mrb[0].mxu0
    %v1977 = vadd.f32 0.0, %v1976
    %v1978 = vpop.f32.mrb[0].mxu0
    %1979 = vdwg.mxu0
    %v1981 = vsel %vm1374, %v155, 0
    %v1984 = vsel %vm1374, %v1184, 0
    %v1987 = vsel %vm1374, %v1187, 0
    %v1990 = vsel %vm1374, %v1192, 0
    %v1993 = vsel %vm1374, %v1195, 0
    %v1996 = vsel %vm1374, %v1200, 0
    %v1999 = vsel %vm1374, %v1203, 0
    %v2002 = vsel %vm1374, %v1208, 0
    %v2005 = vsel %vm1374, %v1211, 0
    %v2008 = vsel %vm1374, %v1216, 0
    %v2011 = vsel %vm1374, %v1219, 0
    %v2014 = vsel %vm1374, %v1224, 0
    %v2017 = vsel %vm1374, %v1227, 0
    %v2020 = vsel %vm1374, %v1232, 0
    %v2023 = vsel %vm1374, %v1235, 0
    %v2026 = vsel %vm1374, %v1240, 0
    %v2029 = vsel %vm1374, %v1243, 0
    %2031 = vmatprep.subr.mxu0 0.0
    %2032 = vmatpush1.xpose.msra.mxu0 %v1984
    %2033 = vmatprep.subr.mxu0 0.0
    %2034 = vmatpush1.xpose.msra.mxu0 %v1987
    %2035 = vmatprep.subr.mxu0 0.0
    %2036 = vmatpush1.xpose.msra.mxu0 %v1990
    %2037 = vmatprep.subr.mxu0 0.0
    %2038 = vmatpush1.xpose.msra.mxu0 %v1993
    %2039 = vmatprep.subr.mxu0 0.0
    %2040 = vmatpush1.xpose.msra.mxu0 %v1996
    %2041 = vmatprep.subr.mxu0 0.0
    %2042 = vmatpush1.xpose.msra.mxu0 %v1999
    %2043 = vmatprep.subr.mxu0 0.0
    %2044 = vmatpush1.xpose.msra.mxu0 %v2002
    %2045 = vmatprep.subr.mxu0 0.0
    %2046 = vmatpush1.xpose.msra.mxu0 %v2005
    %2047 = vmatprep.subr.mxu0 0.0
    %2048 = vmatpush1.xpose.msra.mxu0 %v2008
    %2049 = vmatprep.subr.mxu0 0.0
    %2050 = vmatpush1.xpose.msra.mxu0 %v2011
    %2051 = vmatprep.subr.mxu0 0.0
    %2052 = vmatpush1.xpose.msra.mxu0 %v2014
    %2053 = vmatprep.subr.mxu0 0.0
    %2054 = vmatpush1.xpose.msra.mxu0 %v2017
    %2055 = vmatprep.subr.mxu0 0.0
    %2056 = vmatpush1.xpose.msra.mxu0 %v2020
    %2057 = vmatprep.subr.mxu0 0.0
    %2058 = vmatpush1.xpose.msra.mxu0 %v2023
    %2059 = vmatprep.subr.mxu0 0.0
    %2060 = vmatpush1.xpose.msra.mxu0 %v2026
    %2061 = vmatprep.subr.mxu0 0.0
    %2062 = vmatpush1.xpose.msra.mxu0 %v2029
    %2063 = vmatprep.subr.mxu0 0.0
    %2064 = vmatpush1.xpose.msra.mxu0 0.0
    %2065 = vmatprep.subr.mxu0 0.0
    %2066 = vmatpush1.xpose.msra.mxu0 0.0
    %2067 = vmatprep.subr.mxu0 0.0
    %2068 = vmatpush1.xpose.msra.mxu0 0.0
    %2069 = vmatprep.subr.mxu0 0.0
    %2070 = vmatpush1.xpose.msra.mxu0 0.0
    %2071 = vmatprep.subr.mxu0 0.0
    %2072 = vmatpush1.xpose.msra.mxu0 0.0
    %2073 = vmatprep.subr.mxu0 0.0
    %2074 = vmatpush1.xpose.msra.mxu0 0.0
    %2075 = vmatprep.subr.mxu0 0.0
    %2076 = vmatpush1.xpose.msra.mxu0 0.0
    %2077 = vmatprep.subr.mxu0 0.0
    %2078 = vmatpush1.xpose.msra.mxu0 0.0
    %2079 = vmatprep.subr.mxu0 0.0
    %2080 = vmatpush1.xpose.msra.mxu0 0.0
    %2081 = vmatprep.subr.mxu0 0.0
    %2082 = vmatpush1.xpose.msra.mxu0 0.0
    %2083 = vmatprep.subr.mxu0 0.0
    %2084 = vmatpush1.xpose.msra.mxu0 0.0
    %2085 = vmatprep.subr.mxu0 0.0
    %2086 = vmatpush1.xpose.msra.mxu0 0.0
    %2087 = vmatprep.subr.mxu0 0.0
    %2088 = vmatpush1.xpose.msra.mxu0 0.0
    %2089 = vmatprep.subr.mxu0 0.0
    %2090 = vmatpush1.xpose.msra.mxu0 0.0
    %2091 = vmatprep.subr.mxu0 0.0
    %2092 = vmatpush1.xpose.msra.mxu0 0.0
    %2093 = vmatprep.subr.mxu0 0.0
    %2094 = vmatpush1.xpose.msra.mxu0 0.0
    %2095 = vmatprep.mubr.f32.mxu0 0.0
    %2096 = vmatmul.mubr.f32.gmra.mrb[0].mxu0 %v1981
    %v2097 = vpop.f32.mrb[0].mxu0
    %v2098 = vadd.f32 0.0, %v2097
    %v2099 = vpop.f32.mrb[0].mxu0
    %2100 = vdwg.mxu0
    %v2102 = vsel %vm1374, %v160, 0
    %v2105 = vsel %vm1374, %v1248, 0
    %v2108 = vsel %vm1374, %v1251, 0
    %v2111 = vsel %vm1374, %v1256, 0
    %v2114 = vsel %vm1374, %v1259, 0
    %v2117 = vsel %vm1374, %v1264, 0
    %v2120 = vsel %vm1374, %v1267, 0
    %v2123 = vsel %vm1374, %v1272, 0
    %v2126 = vsel %vm1374, %v1275, 0
    %v2129 = vsel %vm1374, %v1280, 0
    %v2132 = vsel %vm1374, %v1283, 0
    %v2135 = vsel %vm1374, %v1288, 0
    %v2138 = vsel %vm1374, %v1291, 0
    %v2141 = vsel %vm1374, %v1296, 0
    %v2144 = vsel %vm1374, %v1299, 0
    %v2147 = vsel %vm1374, %v1304, 0
    %v2150 = vsel %vm1374, %v1307, 0
    %2152 = vmatprep.subr.mxu0 0.0
    %2153 = vmatpush1.xpose.msra.mxu0 %v2105
    %2154 = vmatprep.subr.mxu0 0.0
    %2155 = vmatpush1.xpose.msra.mxu0 %v2108
    %2156 = vmatprep.subr.mxu0 0.0
    %2157 = vmatpush1.xpose.msra.mxu0 %v2111
    %2158 = vmatprep.subr.mxu0 0.0
    %2159 = vmatpush1.xpose.msra.mxu0 %v2114
    %2160 = vmatprep.subr.mxu0 0.0
    %2161 = vmatpush1.xpose.msra.mxu0 %v2117
    %2162 = vmatprep.subr.mxu0 0.0
    %2163 = vmatpush1.xpose.msra.mxu0 %v2120
    %2164 = vmatprep.subr.mxu0 0.0
    %2165 = vmatpush1.xpose.msra.mxu0 %v2123
    %2166 = vmatprep.subr.mxu0 0.0
    %2167 = vmatpush1.xpose.msra.mxu0 %v2126
    %2168 = vmatprep.subr.mxu0 0.0
    %2169 = vmatpush1.xpose.msra.mxu0 %v2129
    %2170 = vmatprep.subr.mxu0 0.0
    %2171 = vmatpush1.xpose.msra.mxu0 %v2132
    %2172 = vmatprep.subr.mxu0 0.0
    %2173 = vmatpush1.xpose.msra.mxu0 %v2135
    %2174 = vmatprep.subr.mxu0 0.0
    %2175 = vmatpush1.xpose.msra.mxu0 %v2138
    %2176 = vmatprep.subr.mxu0 0.0
    %2177 = vmatpush1.xpose.msra.mxu0 %v2141
    %2178 = vmatprep.subr.mxu0 0.0
    %2179 = vmatpush1.xpose.msra.mxu0 %v2144
    %2180 = vmatprep.subr.mxu0 0.0
    %2181 = vmatpush1.xpose.msra.mxu0 %v2147
    %2182 = vmatprep.subr.mxu0 0.0
    %2183 = vmatpush1.xpose.msra.mxu0 %v2150
    %2184 = vmatprep.subr.mxu0 0.0
    %2185 = vmatpush1.xpose.msra.mxu0 0.0
    %2186 = vmatprep.subr.mxu0 0.0
    %2187 = vmatpush1.xpose.msra.mxu0 0.0
    %2188 = vmatprep.subr.mxu0 0.0
    %2189 = vmatpush1.xpose.msra.mxu0 0.0
    %2190 = vmatprep.subr.mxu0 0.0
    %2191 = vmatpush1.xpose.msra.mxu0 0.0
    %2192 = vmatprep.subr.mxu0 0.0
    %2193 = vmatpush1.xpose.msra.mxu0 0.0
    %2194 = vmatprep.subr.mxu0 0.0
    %2195 = vmatpush1.xpose.msra.mxu0 0.0
    %2196 = vmatprep.subr.mxu0 0.0
    %2197 = vmatpush1.xpose.msra.mxu0 0.0
    %2198 = vmatprep.subr.mxu0 0.0
    %2199 = vmatpush1.xpose.msra.mxu0 0.0
    %2200 = vmatprep.subr.mxu0 0.0
    %2201 = vmatpush1.xpose.msra.mxu0 0.0
    %2202 = vmatprep.subr.mxu0 0.0
    %2203 = vmatpush1.xpose.msra.mxu0 0.0
    %2204 = vmatprep.subr.mxu0 0.0
    %2205 = vmatpush1.xpose.msra.mxu0 0.0
    %2206 = vmatprep.subr.mxu0 0.0
    %2207 = vmatpush1.xpose.msra.mxu0 0.0
    %2208 = vmatprep.subr.mxu0 0.0
    %2209 = vmatpush1.xpose.msra.mxu0 0.0
    %2210 = vmatprep.subr.mxu0 0.0
    %2211 = vmatpush1.xpose.msra.mxu0 0.0
    %2212 = vmatprep.subr.mxu0 0.0
    %2213 = vmatpush1.xpose.msra.mxu0 0.0
    %2214 = vmatprep.subr.mxu0 0.0
    %2215 = vmatpush1.xpose.msra.mxu0 0.0
    %2216 = vmatprep.mubr.f32.mxu0 0.0
    %2217 = vmatmul.mubr.f32.gmra.mrb[0].mxu0 %v2102
    %v2218 = vpop.f32.mrb[0].mxu0
    %v2219 = vadd.f32 0.0, %v2218
    %v2220 = vpop.f32.mrb[0].mxu0
    %2221 = vdwg.mxu0
    %v2223 = vsel %vm1374, %v163, 0
    %v2226 = vsel %vm1374, %v1312, 0
    %v2229 = vsel %vm1374, %v1315, 0
    %v2232 = vsel %vm1374, %v1320, 0
    %v2235 = vsel %vm1374, %v1323, 0
    %v2238 = vsel %vm1374, %v1328, 0
    %v2241 = vsel %vm1374, %v1331, 0
    %v2244 = vsel %vm1374, %v1336, 0
    %v2247 = vsel %vm1374, %v1339, 0
    %v2250 = vsel %vm1374, %v1344, 0
    %v2253 = vsel %vm1374, %v1347, 0
    %v2256 = vsel %vm1374, %v1352, 0
    %v2259 = vsel %vm1374, %v1355, 0
    %v2262 = vsel %vm1374, %v1360, 0
    %v2265 = vsel %vm1374, %v1363, 0
    %v2268 = vsel %vm1374, %v1368, 0
    %v2271 = vsel %vm1374, %v1371, 0
    %2273 = vmatprep.subr.mxu0 0.0
    %2274 = vmatpush1.xpose.msra.mxu0 %v2226
    %2275 = vmatprep.subr.mxu0 0.0
    %2276 = vmatpush1.xpose.msra.mxu0 %v2229
    %2277 = vmatprep.subr.mxu0 0.0
    %2278 = vmatpush1.xpose.msra.mxu0 %v2232
    %2279 = vmatprep.subr.mxu0 0.0
    %2280 = vmatpush1.xpose.msra.mxu0 %v2235
    %2281 = vmatprep.subr.mxu0 0.0
    %2282 = vmatpush1.xpose.msra.mxu0 %v2238
    %2283 = vmatprep.subr.mxu0 0.0
    %2284 = vmatpush1.xpose.msra.mxu0 %v2241
    %2285 = vmatprep.subr.mxu0 0.0
    %2286 = vmatpush1.xpose.msra.mxu0 %v2244
    %2287 = vmatprep.subr.mxu0 0.0
    %2288 = vmatpush1.xpose.msra.mxu0 %v2247
    %2289 = vmatprep.subr.mxu0 0.0
    %2290 = vmatpush1.xpose.msra.mxu0 %v2250
    %2291 = vmatprep.subr.mxu0 0.0
    %2292 = vmatpush1.xpose.msra.mxu0 %v2253
    %2293 = vmatprep.subr.mxu0 0.0
    %2294 = vmatpush1.xpose.msra.mxu0 %v2256
    %2295 = vmatprep.subr.mxu0 0.0
    %2296 = vmatpush1.xpose.msra.mxu0 %v2259
    %2297 = vmatprep.subr.mxu0 0.0
    %2298 = vmatpush1.xpose.msra.mxu0 %v2262
    %2299 = vmatprep.subr.mxu0 0.0
    %2300 = vmatpush1.xpose.msra.mxu0 %v2265
    %2301 = vmatprep.subr.mxu0 0.0
    %2302 = vmatpush1.xpose.msra.mxu0 %v2268
    %2303 = vmatprep.subr.mxu0 0.0
    %2304 = vmatpush1.xpose.msra.mxu0 %v2271
    %2305 = vmatprep.subr.mxu0 0.0
    %2306 = vmatpush1.xpose.msra.mxu0 0.0
    %2307 = vmatprep.subr.mxu0 0.0
    %2308 = vmatpush1.xpose.msra.mxu0 0.0
    %2309 = vmatprep.subr.mxu0 0.0
    %2310 = vmatpush1.xpose.msra.mxu0 0.0
    %2311 = vmatprep.subr.mxu0 0.0
    %2312 = vmatpush1.xpose.msra.mxu0 0.0
    %2313 = vmatprep.subr.mxu0 0.0
    %2314 = vmatpush1.xpose.msra.mxu0 0.0
    %2315 = vmatprep.subr.mxu0 0.0
    %2316 = vmatpush1.xpose.msra.mxu0 0.0
    %2317 = vmatprep.subr.mxu0 0.0
    %2318 = vmatpush1.xpose.msra.mxu0 0.0
    %2319 = vmatprep.subr.mxu0 0.0
    %2320 = vmatpush1.xpose.msra.mxu0 0.0
    %2321 = vmatprep.subr.mxu0 0.0
    %2322 = vmatpush1.xpose.msra.mxu0 0.0
    %2323 = vmatprep.subr.mxu0 0.0
    %2324 = vmatpush1.xpose.msra.mxu0 0.0
    %2325 = vmatprep.subr.mxu0 0.0
    %2326 = vmatpush1.xpose.msra.mxu0 0.0
    %2327 = vmatprep.subr.mxu0 0.0
    %2328 = vmatpush1.xpose.msra.mxu0 0.0
    %2329 = vmatprep.subr.mxu0 0.0
    %2330 = vmatpush1.xpose.msra.mxu0 0.0
    %2331 = vmatprep.subr.mxu0 0.0
    %2332 = vmatpush1.xpose.msra.mxu0 0.0
    %2333 = vmatprep.subr.mxu0 0.0
    %2334 = vmatpush1.xpose.msra.mxu0 0.0
    %2335 = vmatprep.subr.mxu0 0.0
    %2336 = vmatpush1.xpose.msra.mxu0 0.0
    %2337 = vmatprep.mubr.f32.mxu0 0.0
    %2338 = vmatmul.mubr.f32.gmra.mrb[0].mxu0 %v2223
    %v2339 = vpop.f32.mrb[0].mxu0
    %v2340 = vadd.f32 0.0, %v2339
    %v2341 = vpop.f32.mrb[0].mxu0
    %2342 = vdwg.mxu0
    %v2343 = vld [vmem:[%s2] sm:$0xff]
    %v2344 = vld [vmem:[%s3] sm:$0xff]
    %v2345 = vlaneseq
    %v2346 = vshrl.u32 %v2345, 7
    %v2347 = vsub.s32 0, %v2346
    %v2348 = vrot.slane %v2343, %v2347
    %2350 = vbcast.lane.b32.xlu0 %v2348, 256
    %v2351 = vpop.permute.xlu0 %2350
    %v2352 = vlaneseq
    %v2353 = vshrl.u32 %v2352, 7
    %v2354 = vsub.s32 1, %v2353
    %v2355 = vrot.slane %v2343, %v2354
    %2357 = vbcast.lane.b32.xlu0 %v2355, 256
    %v2358 = vpop.permute.xlu0 %2357
    %v2359 = vlaneseq
    %v2360 = vshrl.u32 %v2359, 7
    %v2361 = vsub.s32 2, %v2360
    %v2362 = vrot.slane %v2343, %v2361
    %2364 = vbcast.lane.b32.xlu0 %v2362, 256
    %v2365 = vpop.permute.xlu0 %2364
    %v2366 = vlaneseq
    %v2367 = vshrl.u32 %v2366, 7
    %v2368 = vsub.s32 3, %v2367
    %v2369 = vrot.slane %v2343, %v2368
    %2371 = vbcast.lane.b32.xlu0 %v2369, 256
    %v2372 = vpop.permute.xlu0 %2371
    %v2373 = vlaneseq
    %v2374 = vshrl.u32 %v2373, 7
    %v2375 = vsub.s32 4, %v2374
    %v2376 = vrot.slane %v2343, %v2375
    %2378 = vbcast.lane.b32.xlu0 %v2376, 256
    %v2379 = vpop.permute.xlu0 %2378
    %v2380 = vlaneseq
    %v2381 = vshrl.u32 %v2380, 7
    %v2382 = vsub.s32 5, %v2381
    %v2383 = vrot.slane %v2343, %v2382
    %2385 = vbcast.lane.b32.xlu0 %v2383, 256
    %v2386 = vpop.permute.xlu0 %2385
    %v2387 = vlaneseq
    %v2388 = vshrl.u32 %v2387, 7
    %v2389 = vsub.s32 6, %v2388
    %v2390 = vrot.slane %v2343, %v2389
    %2392 = vbcast.lane.b32.xlu0 %v2390, 256
    %v2393 = vpop.permute.xlu0 %2392
    %v2394 = vlaneseq
    %v2395 = vshrl.u32 %v2394, 7
    %v2396 = vsub.s32 7, %v2395
    %v2397 = vrot.slane %v2343, %v2396
    %2399 = vbcast.lane.b32.xlu0 %v2397, 256
    %v2400 = vpop.permute.xlu0 %2399
    %vm2401 = vcmp.gt.f32.partialorder %v2351, 0.0
    %vm2402 = vcmp.gt.f32.partialorder %v2358, 0.0
    %vm2403 = vcmp.gt.f32.partialorder %v2365, 0.0
    %vm2404 = vcmp.gt.f32.partialorder %v2372, 0.0
    %vm2405 = vcmp.gt.f32.partialorder %v2379, 0.0
    %vm2406 = vcmp.gt.f32.partialorder %v2386, 0.0
    %vm2407 = vcmp.gt.f32.partialorder %v2393, 0.0
    %vm2408 = vcmp.gt.f32.partialorder %v2400, 0.0
    %v2410 = vcombine.high %v2344, %v2344
    %v2412 = vunpack.c.l.s4 1966171168
    %v2413 = vunpack.c.0.s8 %v2412
    %v2414 = vlaneseq
    %v2415 = vshrl.u32 %v2414, 7
    %v2416 = vsub.s32 %v2413, %v2415
    %v2417 = vrot.slane %v2344, %v2416
    %v2419 = vunpack.c.l.s4 1966171168
    %v2420 = vunpack.c.0.s8 %v2419
    %v2421 = vlaneseq
    %v2422 = vshrl.u32 %v2421, 7
    %v2423 = vsub.s32 %v2420, %v2422
    %v2424 = vrot.slane %v2410, %v2423
    %v2425 = vcombine.high %v2417, %v2417
    %v2426 = vcombine.high %v2424, %v2424
    %v2428 = vunpack.c.l.s4 1966171168
    %v2429 = vunpack.c.0.s8 %v2428
    %v2430 = vlaneseq
    %v2431 = vshrl.u32 %v2430, 7
    %v2432 = vsub.s32 %v2429, %v2431
    %v2433 = vrot.slane %v2417, %v2432
    %v2435 = vunpack.c.l.s4 1966171168
    %v2436 = vunpack.c.0.s8 %v2435
    %v2437 = vlaneseq
    %v2438 = vshrl.u32 %v2437, 7
    %v2439 = vsub.s32 %v2436, %v2438
    %v2440 = vrot.slane %v2424, %v2439
    %v2442 = vunpack.c.l.s4 1966171168
    %v2443 = vunpack.c.0.s8 %v2442
    %v2444 = vlaneseq
    %v2445 = vshrl.u32 %v2444, 7
    %v2446 = vsub.s32 %v2443, %v2445
    %v2447 = vrot.slane %v2425, %v2446
    %v2449 = vunpack.c.l.s4 1966171168
    %v2450 = vunpack.c.0.s8 %v2449
    %v2451 = vlaneseq
    %v2452 = vshrl.u32 %v2451, 7
    %v2453 = vsub.s32 %v2450, %v2452
    %v2454 = vrot.slane %v2426, %v2453
    %v2455 = vcombine.high %v2433, %v2433
    %v2456 = vcombine.high %v2440, %v2440
    %v2457 = vcombine.high %v2447, %v2447
    %v2458 = vcombine.high %v2454, %v2454
    %vm2467 = vcmp.gt.f32.partialorder %v2433, 0.0
    %vm2468 = vcmp.gt.f32.partialorder %v2447, 0.0
    %vm2469 = vcmp.gt.f32.partialorder %v2455, 0.0
    %vm2470 = vcmp.gt.f32.partialorder %v2457, 0.0
    %vm2471 = vcmp.gt.f32.partialorder %v2440, 0.0
    %vm2472 = vcmp.gt.f32.partialorder %v2454, 0.0
    %vm2473 = vcmp.gt.f32.partialorder %v2456, 0.0
    %vm2474 = vcmp.gt.f32.partialorder %v2458, 0.0
    %v2475 = vsel %vm2401, 1, 0
    %v2476 = vsel %vm2402, 1, 0
    %v2477 = vsel %vm2403, 1, 0
    %v2478 = vsel %vm2404, 1, 0
    %v2479 = vsel %vm2405, 1, 0
    %v2480 = vsel %vm2406, 1, 0
    %v2481 = vsel %vm2407, 1, 0
    %v2482 = vsel %vm2408, 1, 0
    %vm2483 = vcmp.eq.s32.totalorder %v2475, 1
    %vm2484 = vcmp.eq.s32.totalorder %v2476, 1
    %vm2485 = vcmp.eq.s32.totalorder %v2477, 1
    %vm2486 = vcmp.eq.s32.totalorder %v2478, 1
    %vm2487 = vcmp.eq.s32.totalorder %v2479, 1
    %vm2488 = vcmp.eq.s32.totalorder %v2480, 1
    %vm2489 = vcmp.eq.s32.totalorder %v2481, 1
    %vm2490 = vcmp.eq.s32.totalorder %v2482, 1
    %v2491 = vsel %vm2467, 1, 0
    %v2492 = vsel %vm2468, 1, 0
    %v2493 = vsel %vm2469, 1, 0
    %v2494 = vsel %vm2470, 1, 0
    %v2495 = vsel %vm2471, 1, 0
    %v2496 = vsel %vm2472, 1, 0
    %v2497 = vsel %vm2473, 1, 0
    %v2498 = vsel %vm2474, 1, 0
    %v2499 = vlaneseq
    %v2500 = vshrl.u32 %v2499, 7
    %v2501 = vsub.s32 0, %v2500
    %v2502 = vrot.slane %v2491, %v2501
    %v2503 = vlaneseq
    %v2504 = vshrl.u32 %v2503, 7
    %v2505 = vsub.s32 0, %v2504
    %v2506 = vrot.slane %v2492, %v2505
    %v2507 = vlaneseq
    %v2508 = vshrl.u32 %v2507, 7
    %v2509 = vsub.s32 0, %v2508
    %v2510 = vrot.slane %v2493, %v2509
    %v2511 = vlaneseq
    %v2512 = vshrl.u32 %v2511, 7
    %v2513 = vsub.s32 0, %v2512
    %v2514 = vrot.slane %v2494, %v2513
    %v2515 = vlaneseq
    %v2516 = vshrl.u32 %v2515, 7
    %v2517 = vsub.s32 0, %v2516
    %v2518 = vrot.slane %v2495, %v2517
    %v2519 = vlaneseq
    %v2520 = vshrl.u32 %v2519, 7
    %v2521 = vsub.s32 0, %v2520
    %v2522 = vrot.slane %v2496, %v2521
    %v2523 = vlaneseq
    %v2524 = vshrl.u32 %v2523, 7
    %v2525 = vsub.s32 0, %v2524
    %v2526 = vrot.slane %v2497, %v2525
    %v2527 = vlaneseq
    %v2528 = vshrl.u32 %v2527, 7
    %v2529 = vsub.s32 0, %v2528
    %v2530 = vrot.slane %v2498, %v2529
    %vm2531 = vcmp.eq.s32.totalorder %v2502, 1
    %vm2532 = vcmp.eq.s32.totalorder %v2506, 1
    %vm2533 = vcmp.eq.s32.totalorder %v2510, 1
    %vm2534 = vcmp.eq.s32.totalorder %v2514, 1
    %vm2535 = vcmp.eq.s32.totalorder %v2518, 1
    %vm2536 = vcmp.eq.s32.totalorder %v2522, 1
    %vm2537 = vcmp.eq.s32.totalorder %v2526, 1
    %vm2538 = vcmp.eq.s32.totalorder %v2530, 1
    %vm2539 = vmand %vm2483, %vm2531
    %vm2540 = vmand %vm2484, %vm2532
    %vm2541 = vmand %vm2485, %vm2533
    %vm2542 = vmand %vm2486, %vm2534
    %vm2543 = vmand %vm2487, %vm2535
    %vm2544 = vmand %vm2488, %vm2536
    %vm2545 = vmand %vm2489, %vm2537
    %vm2546 = vmand %vm2490, %vm2538
    %v2547 = vsel %vm2539, %v1493, -1e+09
    %v2548 = vsel %vm2540, %v1614, -1e+09
    %v2549 = vsel %vm2541, %v1735, -1e+09
    %v2550 = vsel %vm2542, %v1856, -1e+09
    %v2551 = vsel %vm2543, %v1977, -1e+09
    %v2552 = vsel %vm2544, %v2098, -1e+09
    %v2553 = vsel %vm2545, %v2219, -1e+09
    %v2554 = vsel %vm2546, %v2340, -1e+09
    %2555 = vmax.xlane.f32.xlu0 %v2547
    %v2556 = vpop.xlane.xlu0 %2555
    %2557 = vmax.xlane.f32.xlu0 %v2548
    %v2558 = vpop.xlane.xlu0 %2557
    %2559 = vmax.xlane.f32.xlu0 %v2549
    %v2560 = vpop.xlane.xlu0 %2559
    %2561 = vmax.xlane.f32.xlu0 %v2550
    %v2562 = vpop.xlane.xlu0 %2561
    %2563 = vmax.xlane.f32.xlu0 %v2551
    %v2564 = vpop.xlane.xlu0 %2563
    %2565 = vmax.xlane.f32.xlu0 %v2552
    %v2566 = vpop.xlane.xlu0 %2565
    %2567 = vmax.xlane.f32.xlu0 %v2553
    %v2568 = vpop.xlane.xlu0 %2567
    %2569 = vmax.xlane.f32.xlu0 %v2554
    %v2570 = vpop.xlane.xlu0 %2569
    %v2571 = vsub.f32 %v2547, %v2556
    %v2572 = vsub.f32 %v2548, %v2558
    %v2573 = vsub.f32 %v2549, %v2560
    %v2574 = vsub.f32 %v2550, %v2562
    %v2575 = vsub.f32 %v2551, %v2564
    %v2576 = vsub.f32 %v2552, %v2566
    %v2577 = vsub.f32 %v2553, %v2568
    %v2578 = vsub.f32 %v2554, %v2570
    %v2579 = vmul.f32 %v2571, 1.442695
    %v2580 = vpow.pop %v2579
    %v2581 = vmul.f32 %v2572, 1.442695
    %v2582 = vpow.pop %v2581
    %v2583 = vmul.f32 %v2573, 1.442695
    %v2584 = vpow.pop %v2583
    %v2585 = vmul.f32 %v2574, 1.442695
    %v2586 = vpow.pop %v2585
    %v2587 = vmul.f32 %v2575, 1.442695
    %v2588 = vpow.pop %v2587
    %v2589 = vmul.f32 %v2576, 1.442695
    %v2590 = vpow.pop %v2589
    %v2591 = vmul.f32 %v2577, 1.442695
    %v2592 = vpow.pop %v2591
    %v2593 = vmul.f32 %v2578, 1.442695
    %v2594 = vpow.pop %v2593
    %2595 = vadd.xlane.f32.xlu0 %v2580
    %v2596 = vpop.xlane.xlu0 %2595
    %2597 = vadd.xlane.f32.xlu0 %v2582
    %v2598 = vpop.xlane.xlu0 %2597
    %2599 = vadd.xlane.f32.xlu0 %v2584
    %v2600 = vpop.xlane.xlu0 %2599
    %2601 = vadd.xlane.f32.xlu0 %v2586
    %v2602 = vpop.xlane.xlu0 %2601
    %2603 = vadd.xlane.f32.xlu0 %v2588
    %v2604 = vpop.xlane.xlu0 %2603
    %2605 = vadd.xlane.f32.xlu0 %v2590
    %v2606 = vpop.xlane.xlu0 %2605
    %2607 = vadd.xlane.f32.xlu0 %v2592
    %v2608 = vpop.xlane.xlu0 %2607
    %2609 = vadd.xlane.f32.xlu0 %v2594
    %v2610 = vpop.xlane.xlu0 %2609
    %v2611 = vlog2.pop %v2596
    %v2612 = vmul.f32 %v2611, 0.6931472
    %v2613 = vlog2.pop %v2598
    %v2614 = vmul.f32 %v2613, 0.6931472
    %v2615 = vlog2.pop %v2600
    %v2616 = vmul.f32 %v2615, 0.6931472
    %v2617 = vlog2.pop %v2602
    %v2618 = vmul.f32 %v2617, 0.6931472
    %v2619 = vlog2.pop %v2604
    %v2620 = vmul.f32 %v2619, 0.6931472
    %v2621 = vlog2.pop %v2606
    %v2622 = vmul.f32 %v2621, 0.6931472
    %v2623 = vlog2.pop %v2608
    %v2624 = vmul.f32 %v2623, 0.6931472
    %v2625 = vlog2.pop %v2610
    %v2626 = vmul.f32 %v2625, 0.6931472
    %v2627 = vrcp.pop %v2596
    %v2628 = vrcp.pop %v2598
    %v2629 = vrcp.pop %v2600
    %v2630 = vrcp.pop %v2602
    %v2631 = vrcp.pop %v2604
    %v2632 = vrcp.pop %v2606
    %v2633 = vrcp.pop %v2608
    %v2634 = vrcp.pop %v2610
    %v2635 = vld [vmem:[%s4] sm:$0xff]
    %v2636 = vlaneseq
    %v2637 = vand.u32 %v2636, 127
    %v2638 = vlaneseq
    %v2639 = vshrl.u32 %v2638, 7
    %v2640 = vsub.s32 0, %v2639
    %v2641 = vrot.slane %v2635, %v2640
    %2643 = vbcast.lane.b32.xlu0 %v2641, 256
    %v2644 = vpop.permute.xlu0 %2643
    %v2645 = vlaneseq
    %v2646 = vshrl.u32 %v2645, 7
    %v2647 = vsub.s32 1, %v2646
    %v2648 = vrot.slane %v2635, %v2647
    %2650 = vbcast.lane.b32.xlu0 %v2648, 256
    %v2651 = vpop.permute.xlu0 %2650
    %v2652 = vlaneseq
    %v2653 = vshrl.u32 %v2652, 7
    %v2654 = vsub.s32 2, %v2653
    %v2655 = vrot.slane %v2635, %v2654
    %2657 = vbcast.lane.b32.xlu0 %v2655, 256
    %v2658 = vpop.permute.xlu0 %2657
    %v2659 = vlaneseq
    %v2660 = vshrl.u32 %v2659, 7
    %v2661 = vsub.s32 3, %v2660
    %v2662 = vrot.slane %v2635, %v2661
    %2664 = vbcast.lane.b32.xlu0 %v2662, 256
    %v2665 = vpop.permute.xlu0 %2664
    %v2666 = vlaneseq
    %v2667 = vshrl.u32 %v2666, 7
    %v2668 = vsub.s32 4, %v2667
    %v2669 = vrot.slane %v2635, %v2668
    %2671 = vbcast.lane.b32.xlu0 %v2669, 256
    %v2672 = vpop.permute.xlu0 %2671
    %v2673 = vlaneseq
    %v2674 = vshrl.u32 %v2673, 7
    %v2675 = vsub.s32 5, %v2674
    %v2676 = vrot.slane %v2635, %v2675
    %2678 = vbcast.lane.b32.xlu0 %v2676, 256
    %v2679 = vpop.permute.xlu0 %2678
    %v2680 = vlaneseq
    %v2681 = vshrl.u32 %v2680, 7
    %v2682 = vsub.s32 6, %v2681
    %v2683 = vrot.slane %v2635, %v2682
    %2685 = vbcast.lane.b32.xlu0 %v2683, 256
    %v2686 = vpop.permute.xlu0 %2685
    %v2687 = vlaneseq
    %v2688 = vshrl.u32 %v2687, 7
    %v2689 = vsub.s32 7, %v2688
    %v2690 = vrot.slane %v2635, %v2689
    %2692 = vbcast.lane.b32.xlu0 %v2690, 256
    %v2693 = vpop.permute.xlu0 %2692
    %vm2694 = vcmp.eq.s32.totalorder %v2637, %v2644
    %vm2695 = vcmp.eq.s32.totalorder %v2637, %v2651
    %vm2696 = vcmp.eq.s32.totalorder %v2637, %v2658
    %vm2697 = vcmp.eq.s32.totalorder %v2637, %v2665
    %vm2698 = vcmp.eq.s32.totalorder %v2637, %v2672
    %vm2699 = vcmp.eq.s32.totalorder %v2637, %v2679
    %vm2700 = vcmp.eq.s32.totalorder %v2637, %v2686
    %vm2701 = vcmp.eq.s32.totalorder %v2637, %v2693
    %v2702 = vsel %vm2694, %v2547, -1e+09
    %v2703 = vsel %vm2695, %v2548, -1e+09
    %v2704 = vsel %vm2696, %v2549, -1e+09
    %v2705 = vsel %vm2697, %v2550, -1e+09
    %v2706 = vsel %vm2698, %v2551, -1e+09
    %v2707 = vsel %vm2699, %v2552, -1e+09
    %v2708 = vsel %vm2700, %v2553, -1e+09
    %v2709 = vsel %vm2701, %v2554, -1e+09
    %2710 = vmax.xlane.f32.xlu0 %v2702
    %v2711 = vpop.xlane.xlu0 %2710
    %2712 = vmax.xlane.f32.xlu0 %v2703
    %v2713 = vpop.xlane.xlu0 %2712
    %2714 = vmax.xlane.f32.xlu0 %v2704
    %v2715 = vpop.xlane.xlu0 %2714
    %2716 = vmax.xlane.f32.xlu0 %v2705
    %v2717 = vpop.xlane.xlu0 %2716
    %2718 = vmax.xlane.f32.xlu0 %v2706
    %v2719 = vpop.xlane.xlu0 %2718
    %2720 = vmax.xlane.f32.xlu0 %v2707
    %v2721 = vpop.xlane.xlu0 %2720
    %2722 = vmax.xlane.f32.xlu0 %v2708
    %v2723 = vpop.xlane.xlu0 %2722
    %2724 = vmax.xlane.f32.xlu0 %v2709
    %v2725 = vpop.xlane.xlu0 %2724
    %v2726 = vsub.f32 %v2711, %v2556
    %v2727 = vsub.f32 %v2713, %v2558
    %v2728 = vsub.f32 %v2715, %v2560
    %v2729 = vsub.f32 %v2717, %v2562
    %v2730 = vsub.f32 %v2719, %v2564
    %v2731 = vsub.f32 %v2721, %v2566
    %v2732 = vsub.f32 %v2723, %v2568
    %v2733 = vsub.f32 %v2725, %v2570
    %v2734 = vsub.f32 %v2726, %v2612
    %v2735 = vsub.f32 %v2727, %v2614
    %v2736 = vsub.f32 %v2728, %v2616
    %v2737 = vsub.f32 %v2729, %v2618
    %v2738 = vsub.f32 %v2730, %v2620
    %v2739 = vsub.f32 %v2731, %v2622
    %v2740 = vsub.f32 %v2732, %v2624
    %v2741 = vsub.f32 %v2733, %v2626
    %v2742 = vmul.f32 %v2580, %v2571
    %v2743 = vmul.f32 %v2582, %v2572
    %v2744 = vmul.f32 %v2584, %v2573
    %v2745 = vmul.f32 %v2586, %v2574
    %v2746 = vmul.f32 %v2588, %v2575
    %v2747 = vmul.f32 %v2590, %v2576
    %v2748 = vmul.f32 %v2592, %v2577
    %v2749 = vmul.f32 %v2594, %v2578
    %2750 = vadd.xlane.f32.xlu0 %v2742
    %v2751 = vpop.xlane.xlu0 %2750
    %2752 = vadd.xlane.f32.xlu0 %v2743
    %v2753 = vpop.xlane.xlu0 %2752
    %2754 = vadd.xlane.f32.xlu0 %v2744
    %v2755 = vpop.xlane.xlu0 %2754
    %2756 = vadd.xlane.f32.xlu0 %v2745
    %v2757 = vpop.xlane.xlu0 %2756
    %2758 = vadd.xlane.f32.xlu0 %v2746
    %v2759 = vpop.xlane.xlu0 %2758
    %2760 = vadd.xlane.f32.xlu0 %v2747
    %v2761 = vpop.xlane.xlu0 %2760
    %2762 = vadd.xlane.f32.xlu0 %v2748
    %v2763 = vpop.xlane.xlu0 %2762
    %2764 = vadd.xlane.f32.xlu0 %v2749
    %v2765 = vpop.xlane.xlu0 %2764
    %v2766 = vmul.f32 %v2751, %v2627
    %v2767 = vmul.f32 %v2753, %v2628
    %v2768 = vmul.f32 %v2755, %v2629
    %v2769 = vmul.f32 %v2757, %v2630
    %v2770 = vmul.f32 %v2759, %v2631
    %v2771 = vmul.f32 %v2761, %v2632
    %v2772 = vmul.f32 %v2763, %v2633
    %v2773 = vmul.f32 %v2765, %v2634
    %v2774 = vsub.f32 %v2612, %v2766
    %v2775 = vsub.f32 %v2614, %v2767
    %v2776 = vsub.f32 %v2616, %v2768
    %v2777 = vsub.f32 %v2618, %v2769
    %v2778 = vsub.f32 %v2620, %v2770
    %v2779 = vsub.f32 %v2622, %v2771
    %v2780 = vsub.f32 %v2624, %v2772
    %v2781 = vsub.f32 %v2626, %v2773
    %2782 = vst [vmem:[#allocation2] sm:$0xff] %v2547
    %2783 = vst [vmem:[#allocation2 + $0x8] sm:$0xff] %v2548
    %2784 = vst [vmem:[#allocation2 + $0x10] sm:$0xff] %v2549
    %2785 = vst [vmem:[#allocation2 + $0x18] sm:$0xff] %v2550
    %2786 = vst [vmem:[#allocation2 + $0x20] sm:$0xff] %v2551
    %2787 = vst [vmem:[#allocation2 + $0x28] sm:$0xff] %v2552
    %2788 = vst [vmem:[#allocation2 + $0x30] sm:$0xff] %v2553
    %2789 = vst [vmem:[#allocation2 + $0x38] sm:$0xff] %v2554
    %v2798 = vlaneseq
    %v2799 = vshrl.u32 %v2798, 7
    %v2800 = vsub.s32 %v2637, %v2799
    %v2801 = vrot.slane %v2734, %v2800
    %v2802 = vadd.s32 %v2637, 4294967288
    %v2803 = vlaneseq
    %v2804 = vshrl.u32 %v2803, 7
    %v2805 = vsub.s32 %v2802, %v2804
    %v2806 = vrot.slane %v2735, %v2805
    %vm2807 = vcmask 130112
    %v2808 = vsel %vm2807, %v2806, %v2801
    %v2809 = vadd.s32 %v2637, 4294967280
    %v2810 = vlaneseq
    %v2811 = vshrl.u32 %v2810, 7
    %v2812 = vsub.s32 %v2809, %v2811
    %v2813 = vrot.slane %v2736, %v2812
    %vm2814 = vcmask 195712
    %v2815 = vsel %vm2814, %v2813, %v2808
    %v2816 = vadd.s32 %v2637, 4294967272
    %v2817 = vlaneseq
    %v2818 = vshrl.u32 %v2817, 7
    %v2819 = vsub.s32 %v2816, %v2818
    %v2820 = vrot.slane %v2737, %v2819
    %vm2821 = vcmask 261312
    %v2822 = vsel %vm2821, %v2820, %v2815
    %v2823 = vadd.s32 %v2637, 4294967264
    %v2824 = vlaneseq
    %v2825 = vshrl.u32 %v2824, 7
    %v2826 = vsub.s32 %v2823, %v2825
    %v2827 = vrot.slane %v2738, %v2826
    %vm2828 = vcmask 326912
    %v2829 = vsel %vm2828, %v2827, %v2822
    %v2830 = vadd.s32 %v2637, 4294967256
    %v2831 = vlaneseq
    %v2832 = vshrl.u32 %v2831, 7
    %v2833 = vsub.s32 %v2830, %v2832
    %v2834 = vrot.slane %v2739, %v2833
    %vm2835 = vcmask 392512
    %v2836 = vsel %vm2835, %v2834, %v2829
    %v2837 = vadd.s32 %v2637, 4294967248
    %v2838 = vlaneseq
    %v2839 = vshrl.u32 %v2838, 7
    %v2840 = vsub.s32 %v2837, %v2839
    %v2841 = vrot.slane %v2740, %v2840
    %vm2842 = vcmask 458112
    %v2843 = vsel %vm2842, %v2841, %v2836
    %v2844 = vadd.s32 %v2637, 4294967240
    %v2845 = vlaneseq
    %v2846 = vshrl.u32 %v2845, 7
    %v2847 = vsub.s32 %v2844, %v2846
    %v2848 = vrot.slane %v2741, %v2847
    %vm2849 = vcmask 523712
    %v2850 = vsel %vm2849, %v2848, %v2843
    %v2860 = vlaneseq
    %v2861 = vshrl.u32 %v2860, 7
    %v2862 = vsub.s32 %v2637, %v2861
    %v2863 = vrot.slane %v2774, %v2862
    %v2864 = vlaneseq
    %v2865 = vshrl.u32 %v2864, 7
    %v2866 = vsub.s32 %v2802, %v2865
    %v2867 = vrot.slane %v2775, %v2866
    %v2868 = vsel %vm2807, %v2867, %v2863
    %v2869 = vlaneseq
    %v2870 = vshrl.u32 %v2869, 7
    %v2871 = vsub.s32 %v2809, %v2870
    %v2872 = vrot.slane %v2776, %v2871
    %v2873 = vsel %vm2814, %v2872, %v2868
    %v2874 = vlaneseq
    %v2875 = vshrl.u32 %v2874, 7
    %v2876 = vsub.s32 %v2816, %v2875
    %v2877 = vrot.slane %v2777, %v2876
    %v2878 = vsel %vm2821, %v2877, %v2873
    %v2879 = vlaneseq
    %v2880 = vshrl.u32 %v2879, 7
    %v2881 = vsub.s32 %v2823, %v2880
    %v2882 = vrot.slane %v2778, %v2881
    %v2883 = vsel %vm2828, %v2882, %v2878
    %v2884 = vlaneseq
    %v2885 = vshrl.u32 %v2884, 7
    %v2886 = vsub.s32 %v2830, %v2885
    %v2887 = vrot.slane %v2779, %v2886
    %v2888 = vsel %vm2835, %v2887, %v2883
    %v2889 = vlaneseq
    %v2890 = vshrl.u32 %v2889, 7
    %v2891 = vsub.s32 %v2837, %v2890
    %v2892 = vrot.slane %v2780, %v2891
    %v2893 = vsel %vm2842, %v2892, %v2888
    %v2894 = vlaneseq
    %v2895 = vshrl.u32 %v2894, 7
    %v2896 = vsub.s32 %v2844, %v2895
    %v2897 = vrot.slane %v2781, %v2896
    %v2898 = vsel %vm2849, %v2897, %v2893
    %vm2900 = vcmask 1040384
    %v2901 = vsel %vm2900, %v2850, %v2898
    %vm2902 = vcmask 517120
    %2903 = vst.msk [vmem:[#allocation4] sm:$0x3] %vm2902, %v2901
    // Predicated region
    $region38: #{tpu_custom_call.1} parent=1 // pred_check
      _
    $region39: #{tpu_custom_call.1} parent=1 // pred_check_branch
      %2905 = sbr.rel (0) target = $region41
    $region40: #{tpu_custom_call.1} parent=1 // pred_region
      %s2907 = ssub.s32 1024, 1024
      %2908 = vsyncadd [#allocation3], %s2907
      %s2909 = sshll.u32 [#allocation2], 4
      %s2910 = int_to_ptr.vmem [resolvable:$true] %s2909
      %2915 = dma.vmem_to_hbm [thread:$0]  %s2910, 1024, %s9, [#allocation3], 128, 128, 8
    $region41: #{tpu_custom_call.1} parent=1 // pred_fallthru
      _
    // Predicated region
    $region42: #{tpu_custom_call.1} parent=1 // pred_check
      _
    $region43: #{tpu_custom_call.1} parent=1 // pred_check_branch
      %2917 = sbr.rel (0) target = $region45
    $region44: #{tpu_custom_call.1} parent=1 // pred_region
      %s2919 = ssub.s32 32, 32
      %2920 = vsyncadd [#allocation5], %s2919
      %s2922 = sshll.u32 [#allocation4], 4
      %s2923 = int_to_ptr.vmem [resolvable:$true] %s2922
      %2925 = dma.vmem_to_hbm [thread:$0]  %s2923, 32, %s10, [#allocation5]
    $region45: #{tpu_custom_call.1} parent=1 // pred_fallthru
      _
    // Predicated region
    $region46: #{tpu_custom_call.1} parent=1 // pred_check
      _
    $region47: #{tpu_custom_call.1} parent=1 // pred_check_branch
      %2927 = sbr.rel (0) target = $region49
    $region48: #{tpu_custom_call.1} parent=1 // pred_region
      %2928 = dma.done [#allocation3], 1024
    $region49: #{tpu_custom_call.1} parent=1 // pred_fallthru
      _
    // Predicated region
    $region50: #{tpu_custom_call.1} parent=1 // pred_check
      _
    $region51: #{tpu_custom_call.1} parent=1 // pred_check_branch
      %2930 = sbr.rel (0) target = $region53
    $region52: #{tpu_custom_call.1} parent=1 // pred_region
      %2931 = dma.done [#allocation5], 32
    $region53: #{tpu_custom_call.1} parent=1 // pred_fallthru
      _
    %2932 = vsyncpa [#allocation3], 1
    %2933 = vsyncpa [#allocation5], 1

</llo_original>
